<compile_context>
chip_gen: v7x
topology: tpu7x:2x2x1
jax: 0.10.0
libtpu: 0.0.40
codegen_flags: <defaults>
</compile_context>

<pallas_src>
import functools

import jax
import jax.numpy as jnp
from jax import lax
from jax.experimental import pallas as pl
from jax.experimental.pallas import tpu as pltpu


_CPARAMS = pltpu.CompilerParams(
    dimension_semantics=("parallel",),
    vmem_limit_bytes=48 * 1024 * 1024,
)


def _pick_tile(n, row_bytes, target_bytes=6 << 20):
    """Largest candidate tile that divides n and keeps the input block <= target_bytes."""
    fallback = n
    for t in (16384, 8192, 4096, 2048, 1024, 512, 256, 128, 64, 32, 16, 8):
        if n % t == 0:
            fallback = t
            if t * row_bytes <= target_bytes:
                return t
    return fallback


# ----------------------- fused LayerNorm (WithBias) + 1x1 conv -----------------------
def _ln_mm_kernel(x_ref, g_ref, b_ref, w_ref, o_ref):
    x = x_ref[...]                                              # (tile, Cin)
    mu = jnp.mean(x, axis=-1, keepdims=True)
    xc = x - mu
    var = jnp.mean(xc * xc, axis=-1, keepdims=True)             # unbiased=False
    y = xc * lax.rsqrt(var + 1e-5) * g_ref[...] + b_ref[...]    # EUP rsqrt, not VALU div
    o_ref[...] = jnp.dot(y, w_ref[...], preferred_element_type=jnp.float32)


def ln_matmul(x2d, g, b, w):
    n, cin = x2d.shape
    cout = w.shape[1]
    tile = _pick_tile(n, row_bytes=4 * (cin + cout))            # byte-targeted tile size
    return pl.pallas_call(
        _ln_mm_kernel,
        out_shape=jax.ShapeDtypeStruct((n, cout), jnp.float32),
        grid=(n // tile,),
        in_specs=[pl.BlockSpec((tile, cin), lambda i: (i, 0)),
                  pl.BlockSpec((1, cin), lambda i: (0, 0)),
                  pl.BlockSpec((1, cin), lambda i: (0, 0)),
                  pl.BlockSpec((cin, cout), lambda i: (0, 0))],
        out_specs=pl.BlockSpec((tile, cout), lambda i: (i, 0)),
        compiler_params=_CPARAMS,
    )(x2d, g.reshape(1, cin), b.reshape(1, cin), w)


# -------------- in-kernel depthwise 3x3 conv with a VMEM-staged zero halo ------------
_COL_OFF = 8   # sublane-aligned column-halo offset -> the centre store is tile-aligned


def _dw3x3(pad_ref, x_hwc, w9c, H, W):
    """out[i,j,c] = sum_{kh,kw} xpad[i+kh, j+kw, c] * w9c[kh*3+kw, c]   (padding=1)."""
    pad_ref[...] = jnp.zeros_like(pad_ref)                        # zero halo ring
    pad_ref[1:H + 1, _COL_OFF:_COL_OFF + W, :] = x_hwc            # aligned centre store
    acc = None
    for kh in range(3):
        for kw in range(3):
            tap = (pad_ref[kh:kh + H, _COL_OFF - 1 + kw:_COL_OFF - 1 + kw + W, :]
                   * w9c[kh * 3 + kw][None, None, :])
            acc = tap if acc is None else acc + tap
    return acc                                                    # (H, W, C)


def _dw_scratch(h, w, c):
    return pltpu.VMEM((h + 2, w + _COL_OFF + 2, c), jnp.float32)


# --- qkv depthwise 3x3 + channel attention (full-C Gram) + project_out + residual ----
def _attn_fused_kernel(qkv_ref, wdw_ref, t_ref, res_ref, wproj_ref, o_ref, pad_ref,
                       *, H, W, C, num_heads):
    ch = C // num_heads
    conv = _dw3x3(pad_ref, qkv_ref[0], wdw_ref[...], H, W)        # (H, W, 3C)
    qkv = conv.reshape(H * W, 3 * C)                              # lane dim unchanged -> cheap

    q = qkv[:, :C]
    k = qkv[:, C:2 * C]
    v = qkv[:, 2 * C:]

    # F.normalize over the token (spatial) axis; per-head temperature folded into q.
    inv_qn = lax.rsqrt(jnp.maximum(jnp.sum(q * q, axis=0, keepdims=True), 1e-24))
    inv_kn = lax.rsqrt(jnp.maximum(jnp.sum(k * k, axis=0, keepdims=True), 1e-24))
    qn = q * (inv_qn * t_ref[...])                                # (HW, C)
    kn = k * inv_kn                                               # (HW, C)

    # One full-C Gram matmul on the MXU: G[c1, c2] = sum_n qn[n, c1] * kn[n, c2]
    g = lax.dot_general(qn, kn, (((0,), (0,)), ((), ())),
                        preferred_element_type=jnp.float32)       # (C, C)

    # Block-diagonal per-head softmax: mask cross-head entries out.
    row_h = lax.broadcasted_iota(jnp.int32, (C, C), 0) // ch
    col_h = lax.broadcasted_iota(jnp.int32, (C, C), 1) // ch
    g = jnp.where(row_h == col_h, g, -1e30)
    g = g - jnp.max(g, axis=-1, keepdims=True)
    e = jnp.exp(g)
    p = e * pl.reciprocal(jnp.sum(e, axis=-1, keepdims=True), approx=True)  # (C, C) block-diag

    # project_out folded into the output matmul:  out = res + V @ (P^T W_proj)
    w_eff = lax.dot_general(p, wproj_ref[...], (((0,), (0,)), ((), ())),
                            preferred_element_type=jnp.float32)   # (C, C)
    o_ref[0] = res_ref[0] + jnp.dot(v, w_eff, preferred_element_type=jnp.float32)


def attention_block(qkv_hwc, res_bt, temp_chan, w_dw, w_proj, *, num_heads):
    b, h, w, c3 = qkv_hwc.shape
    c = c3 // 3
    hw = h * w
    kern = functools.partial(_attn_fused_kernel, H=h, W=w, C=c, num_heads=num_heads)
    return pl.pallas_call(
        kern,
        out_shape=jax.ShapeDtypeStruct((b, hw, c), jnp.float32),
        grid=(b,),
        in_specs=[pl.BlockSpec((1, h, w, c3), lambda i: (i, 0, 0, 0)),
                  pl.BlockSpec((9, c3), lambda i: (0, 0)),
                  pl.BlockSpec((1, c), lambda i: (0, 0)),
                  pl.BlockSpec((1, hw, c), lambda i: (i, 0, 0)),
                  pl.BlockSpec((c, c), lambda i: (0, 0))],
        out_specs=pl.BlockSpec((1, hw, c), lambda i: (i, 0, 0)),
        scratch_shapes=[_dw_scratch(h, w, c3)],
        compiler_params=_CPARAMS,
    )(qkv_hwc, w_dw, temp_chan, res_bt, w_proj)


# --------- ffn depthwise 3x3 + GELU gate + 1x1 project_out + residual add ------------
def _ffn_fused_kernel(f_ref, wdw_ref, wout_ref, res_ref, o_ref, pad_ref, *, H, W, hidden):
    conv = _dw3x3(pad_ref, f_ref[0], wdw_ref[...], H, W)          # (H, W, 2*hidden)
    f = conv.reshape(H * W, 2 * hidden)
    # TODO(synk): emit gate/value halves as separate lane-aligned tensors from the
    # project_in matmul to avoid this unaligned lane slice when hidden % 128 != 0.
    gate = jax.nn.gelu(f[:, :hidden], approximate=False) * f[:, hidden:]
    o_ref[0] = res_ref[0] + jnp.dot(gate, wout_ref[...], preferred_element_type=jnp.float32)


def ffn_block(f_hwc, res_bt, w_dw, w_out):
    b, h, w, c2 = f_hwc.shape
    hidden = c2 // 2
    hw = h * w
    c = w_out.shape[1]
    kern = functools.partial(_ffn_fused_kernel, H=h, W=w, hidden=hidden)
    return pl.pallas_call(
        kern,
        out_shape=jax.ShapeDtypeStruct((b, hw, c), jnp.float32),
        grid=(b,),
        in_specs=[pl.BlockSpec((1, h, w, c2), lambda i: (i, 0, 0, 0)),
                  pl.BlockSpec((9, c2), lambda i: (0, 0)),
                  pl.BlockSpec((hidden, c), lambda i: (0, 0)),
                  pl.BlockSpec((1, hw, c), lambda i: (i, 0, 0))],
        out_specs=pl.BlockSpec((1, hw, c), lambda i: (i, 0, 0)),
        scratch_shapes=[_dw_scratch(h, w, c2)],
        compiler_params=_CPARAMS,
    )(f_hwc, w_dw, w_out, res_bt)


# ----------------------------------- TransformerBlock --------------------------------
def transformer_block(x_nchw, params):
    B, C, H, W = x_nchw.shape
    nh = params["num_heads"]
    assert C % nh == 0
    N = B * H * W
    HW = H * W
    hidden = params["w_in"].shape[1] // 2

    x_tok = jnp.transpose(x_nchw, (0, 2, 3, 1)).reshape(N, C)          # only transpose #1
    temp_chan = jnp.repeat(params["temperature"].reshape(nh), C // nh).reshape(1, C)

    # ---- x = x + project_out(attn(dwconv(qkv(norm1(x))))) ----
    qkv_tok = ln_matmul(x_tok, params["ln1_w"], params["ln1_b"], params["w_qkv"])   # (N, 3C)
    x_bt = attention_block(qkv_tok.reshape(B, H, W, 3 * C), x_tok.reshape(B, HW, C),
                           temp_chan, params["w_dw_qkv"], params["w_proj"],
                           num_heads=nh)                                            # (B, HW, C)

    # ---- x = x + ffn(norm2(x)) ----
    f_tok = ln_matmul(x_bt.reshape(N, C), params["ln2_w"], params["ln2_b"], params["w_in"])
    x_bt = ffn_block(f_tok.reshape(B, H, W, 2 * hidden), x_bt,
                     params["w_dw_ffn"], params["w_out"])                           # (B, HW, C)

    return jnp.transpose(x_bt.reshape(B, H, W, C), (0, 3, 1, 2))       # only transpose #2


# ---------------------------------- pure-JAX reference -------------------------------
def reference_block(x, p):
    B, C, H, W = x.shape
    nh = p["num_heads"]
    ch = C // nh

    def to3d(t):
        return jnp.transpose(t.reshape(B, C, H * W), (0, 2, 1))

    def to4d(t3d):
        return jnp.transpose(t3d, (0, 2, 1)).reshape(B, C, H, W)

    def ln(t, w, b):
        mu = jnp.mean(t, -1, keepdims=True)
        var = jnp.mean((t - mu) ** 2, -1, keepdims=True)
        return (t - mu) / jnp.sqrt(var + 1e-5) * w + b

    def pw(t, w):  # 1x1 conv, weight (Cin, Cout)
        return jnp.einsum('bchw,co->bohw', t, w)

    def dw(t, w9c):  # depthwise 3x3
        c = t.shape[1]
        rhs = jnp.transpose(w9c, (1, 0)).reshape(c, 3, 3)[:, None, :, :]
        return lax.conv_general_dilated(t, rhs, (1, 1), ((1, 1), (1, 1)),
                                        dimension_numbers=('NCHW', 'OIHW', 'NCHW'),
                                        feature_group_count=c)

    # attention
    y = to4d(ln(to3d(x), p["ln1_w"], p["ln1_b"]))
    qkv = dw(pw(y, p["w_qkv"]), p["w_dw_qkv"])
    q, k, v = jnp.split(qkv, 3, axis=1)
    q = q.reshape(B, nh, ch, H * W)
    k = k.reshape(B, nh, ch, H * W)
    v = v.reshape(B, nh, ch, H * W)
    q = q / jnp.maximum(jnp.linalg.norm(q, axis=-1, keepdims=True), 1e-12)
    k = k / jnp.maximum(jnp.linalg.norm(k, axis=-1, keepdims=True), 1e-12)
    attn = jnp.einsum('bhcn,bhdn->bhcd', q, k) * p["temperature"].reshape(1, nh, 1, 1)
    attn = jax.nn.softmax(attn, axis=-1)
    out = jnp.einsum('bhcd,bhdn->bhcn', attn, v).reshape(B, C, H, W)
    x = x + pw(out, p["w_proj"])

    # ffn
    y = to4d(ln(to3d(x), p["ln2_w"], p["ln2_b"]))
    f = dw(pw(y, p["w_in"]), p["w_dw_ffn"])
    x1, x2 = jnp.split(f, 2, axis=1)
    g = jax.nn.gelu(x1, approximate=False) * x2
    return x + pw(g, p["w_out"])


if __name__ == "__main__":
    B, C, H, W = 2, 16, 16, 16
    num_heads = 2
    ffn_expansion_factor = 2.0
    hidden = int(C * ffn_expansion_factor)      # 32; bias=False, LayerNorm_type='WithBias'

    key = jax.random.PRNGKey(0)
    ks = jax.random.split(key, 12)
    s = 0.1
    params = {
        "num_heads": num_heads,
        "ln1_w": 1.0 + 0.1 * jax.random.normal(ks[0], (C,), jnp.float32),
        "ln1_b": 0.1 * jax.random.normal(ks[1], (C,), jnp.float32),
        "w_qkv": s * jax.random.normal(ks[2], (C, 3 * C), jnp.float32),
        "w_dw_qkv": s * jax.random.normal(ks[3], (9, 3 * C), jnp.float32),
        "w_proj": s * jax.random.normal(ks[4], (C, C), jnp.float32),
        "temperature": 1.0 + 0.1 * jax.random.normal(ks[5], (num_heads, 1), jnp.float32),
        "ln2_w": 1.0 + 0.1 * jax.random.normal(ks[6], (C,), jnp.float32),
        "ln2_b": 0.1 * jax.random.normal(ks[7], (C,), jnp.float32),
        "w_in": s * jax.random.normal(ks[8], (C, 2 * hidden), jnp.float32),
        "w_dw_ffn": s * jax.random.normal(ks[9], (9, 2 * hidden), jnp.float32),
        "w_out": s * jax.random.normal(ks[10], (hidden, C), jnp.float32),
    }
    x = jax.random.normal(ks[11], (B, C, H, W), jnp.float32)

    out = jax.block_until_ready(transformer_block(x, params))
    ref = jax.block_until_ready(reference_block(x, params))

    assert out.shape == x.shape, (out.shape, x.shape)
    max_err = float(jnp.max(jnp.abs(out - ref)))
    if not bool(jnp.allclose(out, ref, atol=5e-3, rtol=5e-3)):
        raise AssertionError(f"Pallas output mismatch vs reference, max abs err = {max_err}")
    print("KERNEL_OK")
</pallas_src>

<mosaic_0001>
module attributes {stable_mosaic.version = 11 : i64} {
  func.func @_ln_mm_kernel(%arg0: i32, %arg1: memref<512x16xf32, #tpu.memory_space<vmem>>, %arg2: memref<1x16xf32, #tpu.memory_space<vmem>>, %arg3: memref<1x16xf32, #tpu.memory_space<vmem>>, %arg4: memref<16x48xf32, #tpu.memory_space<vmem>>, %arg5: memref<512x48xf32, #tpu.memory_space<vmem>>) attributes {dimension_semantics = [#tpu.dimension_semantics<parallel>], iteration_bounds = array<i64: 1>, scalar_prefetch = 0 : i64, scratch_operands = 0 : i64, tpu.core_type = #tpu.core_type<tc>, window_params = [{transform_indices = @transform_0, window_bounds = array<i64: 512, 16>}, {pipeline_mode = #tpu.pipeline_mode<synchronous>, transform_indices = @transform_1, window_bounds = array<i64: 1, 16>}, {pipeline_mode = #tpu.pipeline_mode<synchronous>, transform_indices = @transform_2, window_bounds = array<i64: 1, 16>}, {pipeline_mode = #tpu.pipeline_mode<synchronous>, transform_indices = @transform_3, window_bounds = array<i64: 16, 48>}, {transform_indices = @transform_4, window_bounds = array<i64: 512, 48>}]} {
    %c0 = arith.constant 0 : index
    %c0_0 = arith.constant 0 : index
    %0 = vector.load %arg1[%c0, %c0_0] : memref<512x16xf32, #tpu.memory_space<vmem>>, vector<512x16xf32>
    %cst = arith.constant dense<0.000000e+00> : vector<512xf32>
    %1 = vector.multi_reduction <add>, %0, %cst [1] : vector<512x16xf32> to vector<512xf32>
    %2 = vector.shape_cast %1 : vector<512xf32> to vector<512x1xf32>
    %cst_1 = arith.constant 1.600000e+01 : f32
    %3 = vector.broadcast %cst_1 : f32 to vector<512x1xf32>
    %4 = arith.divf %2, %3 : vector<512x1xf32>
    %5 = vector.broadcast %4 : vector<512x1xf32> to vector<512x16xf32>
    %6 = arith.subf %0, %5 : vector<512x16xf32>
    %7 = arith.mulf %6, %6 : vector<512x16xf32>
    %cst_2 = arith.constant dense<0.000000e+00> : vector<512xf32>
    %8 = vector.multi_reduction <add>, %7, %cst_2 [1] : vector<512x16xf32> to vector<512xf32>
    %9 = vector.shape_cast %8 : vector<512xf32> to vector<512x1xf32>
    %cst_3 = arith.constant 1.600000e+01 : f32
    %10 = vector.broadcast %cst_3 : f32 to vector<512x1xf32>
    %11 = arith.divf %9, %10 : vector<512x1xf32>
    %cst_4 = arith.constant 9.99999974E-6 : f32
    %12 = vector.broadcast %cst_4 : f32 to vector<512x1xf32>
    %13 = arith.addf %11, %12 : vector<512x1xf32>
    %14 = math.rsqrt %13 : vector<512x1xf32>
    %15 = vector.broadcast %14 : vector<512x1xf32> to vector<512x16xf32>
    %16 = arith.mulf %6, %15 : vector<512x16xf32>
    %c0_5 = arith.constant 0 : index
    %c0_6 = arith.constant 0 : index
    %17 = vector.load %arg2[%c0_5, %c0_6] : memref<1x16xf32, #tpu.memory_space<vmem>>, vector<1x16xf32>
    %18 = vector.broadcast %17 : vector<1x16xf32> to vector<512x16xf32>
    %19 = arith.mulf %16, %18 : vector<512x16xf32>
    %c0_7 = arith.constant 0 : index
    %c0_8 = arith.constant 0 : index
    %20 = vector.load %arg3[%c0_7, %c0_8] : memref<1x16xf32, #tpu.memory_space<vmem>>, vector<1x16xf32>
    %21 = vector.broadcast %20 : vector<1x16xf32> to vector<512x16xf32>
    %22 = arith.addf %19, %21 : vector<512x16xf32>
    %c0_9 = arith.constant 0 : index
    %c0_10 = arith.constant 0 : index
    %23 = vector.load %arg4[%c0_9, %c0_10] : memref<16x48xf32, #tpu.memory_space<vmem>>, vector<16x48xf32>
    %cst_11 = arith.constant dense<0.000000e+00> : vector<512x48xf32>
    %24 = tpu.matmul %22, %23, %cst_11 {dimension_numbers = #tpu.dot_dimension_numbers<[1], [0], [0], [1], [0, 0, 1, 1], [], []>} : vector<512x16xf32>, vector<16x48xf32>, vector<512x48xf32> -> vector<512x48xf32>
    %c0_12 = arith.constant 0 : index
    %c0_13 = arith.constant 0 : index
    %25 = vector.load %arg5[%c0_12, %c0_13] : memref<512x48xf32, #tpu.memory_space<vmem>>, vector<512x48xf32>
    tpu.vector_store %arg5[%c0_12, %c0_13], %24 {strides = array<i32>} : memref<512x48xf32, #tpu.memory_space<vmem>>, vector<512x48xf32>,
    return
  }
  func.func @transform_0(%arg0: i32) -> (i32, i32) {
    %c0_i32 = arith.constant 0 : i32
    %c0_i32_0 = arith.constant 0 : i32
    return %arg0, %c0_i32 : i32, i32
  }
  func.func @transform_1(%arg0: i32) -> (i32, i32) {
    %c0_i32 = arith.constant 0 : i32
    %c0_i32_0 = arith.constant 0 : i32
    %c0_i32_1 = arith.constant 0 : i32
    return %c0_i32, %c0_i32_0 : i32, i32
  }
  func.func @transform_2(%arg0: i32) -> (i32, i32) {
    %c0_i32 = arith.constant 0 : i32
    %c0_i32_0 = arith.constant 0 : i32
    %c0_i32_1 = arith.constant 0 : i32
    return %c0_i32, %c0_i32_0 : i32, i32
  }
  func.func @transform_3(%arg0: i32) -> (i32, i32) {
    %c0_i32 = arith.constant 0 : i32
    %c0_i32_0 = arith.constant 0 : i32
    %c0_i32_1 = arith.constant 0 : i32
    return %c0_i32, %c0_i32_0 : i32, i32
  }
  func.func @transform_4(%arg0: i32) -> (i32, i32) {
    %c0_i32 = arith.constant 0 : i32
    %c0_i32_0 = arith.constant 0 : i32
    return %arg0, %c0_i32 : i32, i32
  }
}

</mosaic_0001>

<llo_original>
// kernel: tpu_custom_call.1
$region0: #{tpu_custom_call.1}
  #allocation0 [shape = 'u32[]', space=smem, size = 0x4, offset = 0x4, fixed_abs, tag = 'smem constant byte address 0x4 - core index']
  #allocation1 [shape = 'u32[144,128]{1,0:T(1,128)}', space=vmem, size = 0x12000, scoped, tag = 'internal scratch']
  %s0 = inlined_call_operand.vmem [shape: f32[512,16], index: 0, kind: input, shape index: {}]
  %s1 = inlined_call_operand.vmem [shape: f32[1,16], index: 1, kind: input, shape index: {}]
  %s2 = inlined_call_operand.vmem [shape: f32[1,16], index: 2, kind: input, shape index: {}]
  %s3 = inlined_call_operand.vmem [shape: f32[16,48], index: 3, kind: input, shape index: {}]
  %s4 = inlined_call_operand.vmem [shape: f32[512,48], index: 4, kind: output, shape index: {}]
  %s5 = sld [smem:[#allocation0]]
  $region26: #{tpu_custom_call.1} parent=0
    _
  %s7 = ssub.s32 1, %s5
  %s8 = scalar_select 0, %s7, %s5
  // Predicated region
  $region2: #{tpu_custom_call.1} parent=0 // pred_check
    _
  $region3: #{tpu_custom_call.1} parent=0 // pred_check_branch
    %10 = sbr.rel (0) target = $region5
  $region4: #{tpu_custom_call.1} parent=0 // pred_region
    _
  $region5: #{tpu_custom_call.1} parent=0 // pred_fallthru
    _
  // Predicated region
  $region6: #{tpu_custom_call.1} parent=0 // pred_check
    _
  $region7: #{tpu_custom_call.1} parent=0 // pred_check_branch
    %12 = sbr.rel (0) target = $region9
  $region8: #{tpu_custom_call.1} parent=0 // pred_region
    _
  $region9: #{tpu_custom_call.1} parent=0 // pred_fallthru
    _
  // Predicated region
  $region10: #{tpu_custom_call.1} parent=0 // pred_check
    _
  $region11: #{tpu_custom_call.1} parent=0 // pred_check_branch
    %14 = sbr.rel (0) target = $region13
  $region12: #{tpu_custom_call.1} parent=0 // pred_region
    _
  $region13: #{tpu_custom_call.1} parent=0 // pred_fallthru
    _
  // Predicated region
  $region14: #{tpu_custom_call.1} parent=0 // pred_check
    _
  $region15: #{tpu_custom_call.1} parent=0 // pred_check_branch
    %16 = sbr.rel (0) target = $region17
  $region16: #{tpu_custom_call.1} parent=0 // pred_region
    _
  $region17: #{tpu_custom_call.1} parent=0 // pred_fallthru
    _
  %v17 = vld [vmem:[%s0] sm:$0xff]
  %v18 = vld [vmem:[%s0 + $0x8] sm:$0xff]
  %v19 = vld [vmem:[%s0 + $0x10] sm:$0xff]
  %v20 = vld [vmem:[%s0 + $0x18] sm:$0xff]
  %v21 = vld [vmem:[%s0 + $0x20] sm:$0xff]
  %v22 = vld [vmem:[%s0 + $0x28] sm:$0xff]
  %v23 = vld [vmem:[%s0 + $0x30] sm:$0xff]
  %v24 = vld [vmem:[%s0 + $0x38] sm:$0xff]
  %v25 = vld [vmem:[%s0 + $0x40] sm:$0xff]
  %v26 = vld [vmem:[%s0 + $0x48] sm:$0xff]
  %v27 = vld [vmem:[%s0 + $0x50] sm:$0xff]
  %v28 = vld [vmem:[%s0 + $0x58] sm:$0xff]
  %v29 = vld [vmem:[%s0 + $0x60] sm:$0xff]
  %v30 = vld [vmem:[%s0 + $0x68] sm:$0xff]
  %v31 = vld [vmem:[%s0 + $0x70] sm:$0xff]
  %v32 = vld [vmem:[%s0 + $0x78] sm:$0xff]
  %v33 = vld [vmem:[%s0 + $0x80] sm:$0xff]
  %v34 = vld [vmem:[%s0 + $0x88] sm:$0xff]
  %v35 = vld [vmem:[%s0 + $0x90] sm:$0xff]
  %v36 = vld [vmem:[%s0 + $0x98] sm:$0xff]
  %v37 = vld [vmem:[%s0 + $0xa0] sm:$0xff]
  %v38 = vld [vmem:[%s0 + $0xa8] sm:$0xff]
  %v39 = vld [vmem:[%s0 + $0xb0] sm:$0xff]
  %v40 = vld [vmem:[%s0 + $0xb8] sm:$0xff]
  %v41 = vld [vmem:[%s0 + $0xc0] sm:$0xff]
  %v42 = vld [vmem:[%s0 + $0xc8] sm:$0xff]
  %v43 = vld [vmem:[%s0 + $0xd0] sm:$0xff]
  %v44 = vld [vmem:[%s0 + $0xd8] sm:$0xff]
  %v45 = vld [vmem:[%s0 + $0xe0] sm:$0xff]
  %v46 = vld [vmem:[%s0 + $0xe8] sm:$0xff]
  %v47 = vld [vmem:[%s0 + $0xf0] sm:$0xff]
  %v48 = vld [vmem:[%s0 + $0xf8] sm:$0xff]
  %v49 = vld [vmem:[%s0 + $0x100] sm:$0xff]
  %v50 = vld [vmem:[%s0 + $0x108] sm:$0xff]
  %v51 = vld [vmem:[%s0 + $0x110] sm:$0xff]
  %v52 = vld [vmem:[%s0 + $0x118] sm:$0xff]
  %v53 = vld [vmem:[%s0 + $0x120] sm:$0xff]
  %v54 = vld [vmem:[%s0 + $0x128] sm:$0xff]
  %v55 = vld [vmem:[%s0 + $0x130] sm:$0xff]
  %v56 = vld [vmem:[%s0 + $0x138] sm:$0xff]
  %v57 = vld [vmem:[%s0 + $0x140] sm:$0xff]
  %v58 = vld [vmem:[%s0 + $0x148] sm:$0xff]
  %v59 = vld [vmem:[%s0 + $0x150] sm:$0xff]
  %v60 = vld [vmem:[%s0 + $0x158] sm:$0xff]
  %v61 = vld [vmem:[%s0 + $0x160] sm:$0xff]
  %v62 = vld [vmem:[%s0 + $0x168] sm:$0xff]
  %v63 = vld [vmem:[%s0 + $0x170] sm:$0xff]
  %v64 = vld [vmem:[%s0 + $0x178] sm:$0xff]
  %v65 = vld [vmem:[%s0 + $0x180] sm:$0xff]
  %v66 = vld [vmem:[%s0 + $0x188] sm:$0xff]
  %v67 = vld [vmem:[%s0 + $0x190] sm:$0xff]
  %v68 = vld [vmem:[%s0 + $0x198] sm:$0xff]
  %v69 = vld [vmem:[%s0 + $0x1a0] sm:$0xff]
  %v70 = vld [vmem:[%s0 + $0x1a8] sm:$0xff]
  %v71 = vld [vmem:[%s0 + $0x1b0] sm:$0xff]
  %v72 = vld [vmem:[%s0 + $0x1b8] sm:$0xff]
  %v73 = vld [vmem:[%s0 + $0x1c0] sm:$0xff]
  %v74 = vld [vmem:[%s0 + $0x1c8] sm:$0xff]
  %v75 = vld [vmem:[%s0 + $0x1d0] sm:$0xff]
  %v76 = vld [vmem:[%s0 + $0x1d8] sm:$0xff]
  %v77 = vld [vmem:[%s0 + $0x1e0] sm:$0xff]
  %v78 = vld [vmem:[%s0 + $0x1e8] sm:$0xff]
  %v79 = vld [vmem:[%s0 + $0x1f0] sm:$0xff]
  %v80 = vld [vmem:[%s0 + $0x1f8] sm:$0xff]
  %vm81 = vcmask 130048
  %v82 = vsel %vm81, %v17, 0.0
  %83 = vadd.xlane.f32.xlu0 %v82
  %v84 = vpop.xlane.xlu0 %83
  %v85 = vsel %vm81, %v18, 0.0
  %86 = vadd.xlane.f32.xlu0 %v85
  %v87 = vpop.xlane.xlu0 %86
  %v88 = vsel %vm81, %v19, 0.0
  %89 = vadd.xlane.f32.xlu0 %v88
  %v90 = vpop.xlane.xlu0 %89
  %v91 = vsel %vm81, %v20, 0.0
  %92 = vadd.xlane.f32.xlu0 %v91
  %v93 = vpop.xlane.xlu0 %92
  %v94 = vsel %vm81, %v21, 0.0
  %95 = vadd.xlane.f32.xlu0 %v94
  %v96 = vpop.xlane.xlu0 %95
  %v97 = vsel %vm81, %v22, 0.0
  %98 = vadd.xlane.f32.xlu0 %v97
  %v99 = vpop.xlane.xlu0 %98
  %v100 = vsel %vm81, %v23, 0.0
  %101 = vadd.xlane.f32.xlu0 %v100
  %v102 = vpop.xlane.xlu0 %101
  %v103 = vsel %vm81, %v24, 0.0
  %104 = vadd.xlane.f32.xlu0 %v103
  %v105 = vpop.xlane.xlu0 %104
  %v106 = vsel %vm81, %v25, 0.0
  %107 = vadd.xlane.f32.xlu0 %v106
  %v108 = vpop.xlane.xlu0 %107
  %v109 = vsel %vm81, %v26, 0.0
  %110 = vadd.xlane.f32.xlu0 %v109
  %v111 = vpop.xlane.xlu0 %110
  %v112 = vsel %vm81, %v27, 0.0
  %113 = vadd.xlane.f32.xlu0 %v112
  %v114 = vpop.xlane.xlu0 %113
  %v115 = vsel %vm81, %v28, 0.0
  %116 = vadd.xlane.f32.xlu0 %v115
  %v117 = vpop.xlane.xlu0 %116
  %v118 = vsel %vm81, %v29, 0.0
  %119 = vadd.xlane.f32.xlu0 %v118
  %v120 = vpop.xlane.xlu0 %119
  %v121 = vsel %vm81, %v30, 0.0
  %122 = vadd.xlane.f32.xlu0 %v121
  %v123 = vpop.xlane.xlu0 %122
  %v124 = vsel %vm81, %v31, 0.0
  %125 = vadd.xlane.f32.xlu0 %v124
  %v126 = vpop.xlane.xlu0 %125
  %v127 = vsel %vm81, %v32, 0.0
  %128 = vadd.xlane.f32.xlu0 %v127
  %v129 = vpop.xlane.xlu0 %128
  %v130 = vsel %vm81, %v33, 0.0
  %131 = vadd.xlane.f32.xlu0 %v130
  %v132 = vpop.xlane.xlu0 %131
  %v133 = vsel %vm81, %v34, 0.0
  %134 = vadd.xlane.f32.xlu0 %v133
  %v135 = vpop.xlane.xlu0 %134
  %v136 = vsel %vm81, %v35, 0.0
  %137 = vadd.xlane.f32.xlu0 %v136
  %v138 = vpop.xlane.xlu0 %137
  %v139 = vsel %vm81, %v36, 0.0
  %140 = vadd.xlane.f32.xlu0 %v139
  %v141 = vpop.xlane.xlu0 %140
  %v142 = vsel %vm81, %v37, 0.0
  %143 = vadd.xlane.f32.xlu0 %v142
  %v144 = vpop.xlane.xlu0 %143
  %v145 = vsel %vm81, %v38, 0.0
  %146 = vadd.xlane.f32.xlu0 %v145
  %v147 = vpop.xlane.xlu0 %146
  %v148 = vsel %vm81, %v39, 0.0
  %149 = vadd.xlane.f32.xlu0 %v148
  %v150 = vpop.xlane.xlu0 %149
  %v151 = vsel %vm81, %v40, 0.0
  %152 = vadd.xlane.f32.xlu0 %v151
  %v153 = vpop.xlane.xlu0 %152
  %v154 = vsel %vm81, %v41, 0.0
  %155 = vadd.xlane.f32.xlu0 %v154
  %v156 = vpop.xlane.xlu0 %155
  %v157 = vsel %vm81, %v42, 0.0
  %158 = vadd.xlane.f32.xlu0 %v157
  %v159 = vpop.xlane.xlu0 %158
  %v160 = vsel %vm81, %v43, 0.0
  %161 = vadd.xlane.f32.xlu0 %v160
  %v162 = vpop.xlane.xlu0 %161
  %v163 = vsel %vm81, %v44, 0.0
  %164 = vadd.xlane.f32.xlu0 %v163
  %v165 = vpop.xlane.xlu0 %164
  %v166 = vsel %vm81, %v45, 0.0
  %167 = vadd.xlane.f32.xlu0 %v166
  %v168 = vpop.xlane.xlu0 %167
  %v169 = vsel %vm81, %v46, 0.0
  %170 = vadd.xlane.f32.xlu0 %v169
  %v171 = vpop.xlane.xlu0 %170
  %v172 = vsel %vm81, %v47, 0.0
  %173 = vadd.xlane.f32.xlu0 %v172
  %v174 = vpop.xlane.xlu0 %173
  %v175 = vsel %vm81, %v48, 0.0
  %176 = vadd.xlane.f32.xlu0 %v175
  %v177 = vpop.xlane.xlu0 %176
  %v178 = vsel %vm81, %v49, 0.0
  %179 = vadd.xlane.f32.xlu0 %v178
  %v180 = vpop.xlane.xlu0 %179
  %v181 = vsel %vm81, %v50, 0.0
  %182 = vadd.xlane.f32.xlu0 %v181
  %v183 = vpop.xlane.xlu0 %182
  %v184 = vsel %vm81, %v51, 0.0
  %185 = vadd.xlane.f32.xlu0 %v184
  %v186 = vpop.xlane.xlu0 %185
  %v187 = vsel %vm81, %v52, 0.0
  %188 = vadd.xlane.f32.xlu0 %v187
  %v189 = vpop.xlane.xlu0 %188
  %v190 = vsel %vm81, %v53, 0.0
  %191 = vadd.xlane.f32.xlu0 %v190
  %v192 = vpop.xlane.xlu0 %191
  %v193 = vsel %vm81, %v54, 0.0
  %194 = vadd.xlane.f32.xlu0 %v193
  %v195 = vpop.xlane.xlu0 %194
  %v196 = vsel %vm81, %v55, 0.0
  %197 = vadd.xlane.f32.xlu0 %v196
  %v198 = vpop.xlane.xlu0 %197
  %v199 = vsel %vm81, %v56, 0.0
  %200 = vadd.xlane.f32.xlu0 %v199
  %v201 = vpop.xlane.xlu0 %200
  %v202 = vsel %vm81, %v57, 0.0
  %203 = vadd.xlane.f32.xlu0 %v202
  %v204 = vpop.xlane.xlu0 %203
  %v205 = vsel %vm81, %v58, 0.0
  %206 = vadd.xlane.f32.xlu0 %v205
  %v207 = vpop.xlane.xlu0 %206
  %v208 = vsel %vm81, %v59, 0.0
  %209 = vadd.xlane.f32.xlu0 %v208
  %v210 = vpop.xlane.xlu0 %209
  %v211 = vsel %vm81, %v60, 0.0
  %212 = vadd.xlane.f32.xlu0 %v211
  %v213 = vpop.xlane.xlu0 %212
  %v214 = vsel %vm81, %v61, 0.0
  %215 = vadd.xlane.f32.xlu0 %v214
  %v216 = vpop.xlane.xlu0 %215
  %v217 = vsel %vm81, %v62, 0.0
  %218 = vadd.xlane.f32.xlu0 %v217
  %v219 = vpop.xlane.xlu0 %218
  %v220 = vsel %vm81, %v63, 0.0
  %221 = vadd.xlane.f32.xlu0 %v220
  %v222 = vpop.xlane.xlu0 %221
  %v223 = vsel %vm81, %v64, 0.0
  %224 = vadd.xlane.f32.xlu0 %v223
  %v225 = vpop.xlane.xlu0 %224
  %v226 = vsel %vm81, %v65, 0.0
  %227 = vadd.xlane.f32.xlu0 %v226
  %v228 = vpop.xlane.xlu0 %227
  %v229 = vsel %vm81, %v66, 0.0
  %230 = vadd.xlane.f32.xlu0 %v229
  %v231 = vpop.xlane.xlu0 %230
  %v232 = vsel %vm81, %v67, 0.0
  %233 = vadd.xlane.f32.xlu0 %v232
  %v234 = vpop.xlane.xlu0 %233
  %v235 = vsel %vm81, %v68, 0.0
  %236 = vadd.xlane.f32.xlu0 %v235
  %v237 = vpop.xlane.xlu0 %236
  %v238 = vsel %vm81, %v69, 0.0
  %239 = vadd.xlane.f32.xlu0 %v238
  %v240 = vpop.xlane.xlu0 %239
  %v241 = vsel %vm81, %v70, 0.0
  %242 = vadd.xlane.f32.xlu0 %v241
  %v243 = vpop.xlane.xlu0 %242
  %v244 = vsel %vm81, %v71, 0.0
  %245 = vadd.xlane.f32.xlu0 %v244
  %v246 = vpop.xlane.xlu0 %245
  %v247 = vsel %vm81, %v72, 0.0
  %248 = vadd.xlane.f32.xlu0 %v247
  %v249 = vpop.xlane.xlu0 %248
  %v250 = vsel %vm81, %v73, 0.0
  %251 = vadd.xlane.f32.xlu0 %v250
  %v252 = vpop.xlane.xlu0 %251
  %v253 = vsel %vm81, %v74, 0.0
  %254 = vadd.xlane.f32.xlu0 %v253
  %v255 = vpop.xlane.xlu0 %254
  %v256 = vsel %vm81, %v75, 0.0
  %257 = vadd.xlane.f32.xlu0 %v256
  %v258 = vpop.xlane.xlu0 %257
  %v259 = vsel %vm81, %v76, 0.0
  %260 = vadd.xlane.f32.xlu0 %v259
  %v261 = vpop.xlane.xlu0 %260
  %v262 = vsel %vm81, %v77, 0.0
  %263 = vadd.xlane.f32.xlu0 %v262
  %v264 = vpop.xlane.xlu0 %263
  %v265 = vsel %vm81, %v78, 0.0
  %266 = vadd.xlane.f32.xlu0 %v265
  %v267 = vpop.xlane.xlu0 %266
  %v268 = vsel %vm81, %v79, 0.0
  %269 = vadd.xlane.f32.xlu0 %v268
  %v270 = vpop.xlane.xlu0 %269
  %v271 = vsel %vm81, %v80, 0.0
  %272 = vadd.xlane.f32.xlu0 %v271
  %v273 = vpop.xlane.xlu0 %272
  %v274 = vrcp.pop 16.0
  %v275 = vmul.f32 %v84, %v274
  %v276 = vmul.f32 %v87, %v274
  %v277 = vmul.f32 %v90, %v274
  %v278 = vmul.f32 %v93, %v274
  %v279 = vmul.f32 %v96, %v274
  %v280 = vmul.f32 %v99, %v274
  %v281 = vmul.f32 %v102, %v274
  %v282 = vmul.f32 %v105, %v274
  %v283 = vmul.f32 %v108, %v274
  %v284 = vmul.f32 %v111, %v274
  %v285 = vmul.f32 %v114, %v274
  %v286 = vmul.f32 %v117, %v274
  %v287 = vmul.f32 %v120, %v274
  %v288 = vmul.f32 %v123, %v274
  %v289 = vmul.f32 %v126, %v274
  %v290 = vmul.f32 %v129, %v274
  %v291 = vmul.f32 %v132, %v274
  %v292 = vmul.f32 %v135, %v274
  %v293 = vmul.f32 %v138, %v274
  %v294 = vmul.f32 %v141, %v274
  %v295 = vmul.f32 %v144, %v274
  %v296 = vmul.f32 %v147, %v274
  %v297 = vmul.f32 %v150, %v274
  %v298 = vmul.f32 %v153, %v274
  %v299 = vmul.f32 %v156, %v274
  %v300 = vmul.f32 %v159, %v274
  %v301 = vmul.f32 %v162, %v274
  %v302 = vmul.f32 %v165, %v274
  %v303 = vmul.f32 %v168, %v274
  %v304 = vmul.f32 %v171, %v274
  %v305 = vmul.f32 %v174, %v274
  %v306 = vmul.f32 %v177, %v274
  %v307 = vmul.f32 %v180, %v274
  %v308 = vmul.f32 %v183, %v274
  %v309 = vmul.f32 %v186, %v274
  %v310 = vmul.f32 %v189, %v274
  %v311 = vmul.f32 %v192, %v274
  %v312 = vmul.f32 %v195, %v274
  %v313 = vmul.f32 %v198, %v274
  %v314 = vmul.f32 %v201, %v274
  %v315 = vmul.f32 %v204, %v274
  %v316 = vmul.f32 %v207, %v274
  %v317 = vmul.f32 %v210, %v274
  %v318 = vmul.f32 %v213, %v274
  %v319 = vmul.f32 %v216, %v274
  %v320 = vmul.f32 %v219, %v274
  %v321 = vmul.f32 %v222, %v274
  %v322 = vmul.f32 %v225, %v274
  %v323 = vmul.f32 %v228, %v274
  %v324 = vmul.f32 %v231, %v274
  %v325 = vmul.f32 %v234, %v274
  %v326 = vmul.f32 %v237, %v274
  %v327 = vmul.f32 %v240, %v274
  %v328 = vmul.f32 %v243, %v274
  %v329 = vmul.f32 %v246, %v274
  %v330 = vmul.f32 %v249, %v274
  %v331 = vmul.f32 %v252, %v274
  %v332 = vmul.f32 %v255, %v274
  %v333 = vmul.f32 %v258, %v274
  %v334 = vmul.f32 %v261, %v274
  %v335 = vmul.f32 %v264, %v274
  %v336 = vmul.f32 %v267, %v274
  %v337 = vmul.f32 %v270, %v274
  %v338 = vmul.f32 %v273, %v274
  %v339 = vsub.f32 %v17, %v275
  %v340 = vsub.f32 %v18, %v276
  %v341 = vsub.f32 %v19, %v277
  %v342 = vsub.f32 %v20, %v278
  %v343 = vsub.f32 %v21, %v279
  %v344 = vsub.f32 %v22, %v280
  %v345 = vsub.f32 %v23, %v281
  %v346 = vsub.f32 %v24, %v282
  %v347 = vsub.f32 %v25, %v283
  %v348 = vsub.f32 %v26, %v284
  %v349 = vsub.f32 %v27, %v285
  %v350 = vsub.f32 %v28, %v286
  %v351 = vsub.f32 %v29, %v287
  %v352 = vsub.f32 %v30, %v288
  %v353 = vsub.f32 %v31, %v289
  %v354 = vsub.f32 %v32, %v290
  %v355 = vsub.f32 %v33, %v291
  %v356 = vsub.f32 %v34, %v292
  %v357 = vsub.f32 %v35, %v293
  %v358 = vsub.f32 %v36, %v294
  %v359 = vsub.f32 %v37, %v295
  %v360 = vsub.f32 %v38, %v296
  %v361 = vsub.f32 %v39, %v297
  %v362 = vsub.f32 %v40, %v298
  %v363 = vsub.f32 %v41, %v299
  %v364 = vsub.f32 %v42, %v300
  %v365 = vsub.f32 %v43, %v301
  %v366 = vsub.f32 %v44, %v302
  %v367 = vsub.f32 %v45, %v303
  %v368 = vsub.f32 %v46, %v304
  %v369 = vsub.f32 %v47, %v305
  %v370 = vsub.f32 %v48, %v306
  %v371 = vsub.f32 %v49, %v307
  %v372 = vsub.f32 %v50, %v308
  %v373 = vsub.f32 %v51, %v309
  %v374 = vsub.f32 %v52, %v310
  %v375 = vsub.f32 %v53, %v311
  %v376 = vsub.f32 %v54, %v312
  %v377 = vsub.f32 %v55, %v313
  %v378 = vsub.f32 %v56, %v314
  %v379 = vsub.f32 %v57, %v315
  %v380 = vsub.f32 %v58, %v316
  %v381 = vsub.f32 %v59, %v317
  %v382 = vsub.f32 %v60, %v318
  %v383 = vsub.f32 %v61, %v319
  %v384 = vsub.f32 %v62, %v320
  %v385 = vsub.f32 %v63, %v321
  %v386 = vsub.f32 %v64, %v322
  %v387 = vsub.f32 %v65, %v323
  %v388 = vsub.f32 %v66, %v324
  %v389 = vsub.f32 %v67, %v325
  %v390 = vsub.f32 %v68, %v326
  %v391 = vsub.f32 %v69, %v327
  %v392 = vsub.f32 %v70, %v328
  %v393 = vsub.f32 %v71, %v329
  %v394 = vsub.f32 %v72, %v330
  %v395 = vsub.f32 %v73, %v331
  %v396 = vsub.f32 %v74, %v332
  %v397 = vsub.f32 %v75, %v333
  %v398 = vsub.f32 %v76, %v334
  %v399 = vsub.f32 %v77, %v335
  %v400 = vsub.f32 %v78, %v336
  %v401 = vsub.f32 %v79, %v337
  %v402 = vsub.f32 %v80, %v338
  %v403 = vmul.f32 %v339, %v339
  %v404 = vmul.f32 %v340, %v340
  %v405 = vmul.f32 %v341, %v341
  %v406 = vmul.f32 %v342, %v342
  %v407 = vmul.f32 %v343, %v343
  %v408 = vmul.f32 %v344, %v344
  %v409 = vmul.f32 %v345, %v345
  %v410 = vmul.f32 %v346, %v346
  %v411 = vmul.f32 %v347, %v347
  %v412 = vmul.f32 %v348, %v348
  %v413 = vmul.f32 %v349, %v349
  %v414 = vmul.f32 %v350, %v350
  %v415 = vmul.f32 %v351, %v351
  %v416 = vmul.f32 %v352, %v352
  %v417 = vmul.f32 %v353, %v353
  %v418 = vmul.f32 %v354, %v354
  %v419 = vmul.f32 %v355, %v355
  %v420 = vmul.f32 %v356, %v356
  %v421 = vmul.f32 %v357, %v357
  %v422 = vmul.f32 %v358, %v358
  %v423 = vmul.f32 %v359, %v359
  %v424 = vmul.f32 %v360, %v360
  %v425 = vmul.f32 %v361, %v361
  %v426 = vmul.f32 %v362, %v362
  %v427 = vmul.f32 %v363, %v363
  %v428 = vmul.f32 %v364, %v364
  %v429 = vmul.f32 %v365, %v365
  %v430 = vmul.f32 %v366, %v366
  %v431 = vmul.f32 %v367, %v367
  %v432 = vmul.f32 %v368, %v368
  %v433 = vmul.f32 %v369, %v369
  %v434 = vmul.f32 %v370, %v370
  %v435 = vmul.f32 %v371, %v371
  %v436 = vmul.f32 %v372, %v372
  %v437 = vmul.f32 %v373, %v373
  %v438 = vmul.f32 %v374, %v374
  %v439 = vmul.f32 %v375, %v375
  %v440 = vmul.f32 %v376, %v376
  %v441 = vmul.f32 %v377, %v377
  %v442 = vmul.f32 %v378, %v378
  %v443 = vmul.f32 %v379, %v379
  %v444 = vmul.f32 %v380, %v380
  %v445 = vmul.f32 %v381, %v381
  %v446 = vmul.f32 %v382, %v382
  %v447 = vmul.f32 %v383, %v383
  %v448 = vmul.f32 %v384, %v384
  %v449 = vmul.f32 %v385, %v385
  %v450 = vmul.f32 %v386, %v386
  %v451 = vmul.f32 %v387, %v387
  %v452 = vmul.f32 %v388, %v388
  %v453 = vmul.f32 %v389, %v389
  %v454 = vmul.f32 %v390, %v390
  %v455 = vmul.f32 %v391, %v391
  %v456 = vmul.f32 %v392, %v392
  %v457 = vmul.f32 %v393, %v393
  %v458 = vmul.f32 %v394, %v394
  %v459 = vmul.f32 %v395, %v395
  %v460 = vmul.f32 %v396, %v396
  %v461 = vmul.f32 %v397, %v397
  %v462 = vmul.f32 %v398, %v398
  %v463 = vmul.f32 %v399, %v399
  %v464 = vmul.f32 %v400, %v400
  %v465 = vmul.f32 %v401, %v401
  %v466 = vmul.f32 %v402, %v402
  %v467 = vsel %vm81, %v403, 0.0
  %468 = vadd.xlane.f32.xlu0 %v467
  %v469 = vpop.xlane.xlu0 %468
  %v470 = vsel %vm81, %v404, 0.0
  %471 = vadd.xlane.f32.xlu0 %v470
  %v472 = vpop.xlane.xlu0 %471
  %v473 = vsel %vm81, %v405, 0.0
  %474 = vadd.xlane.f32.xlu0 %v473
  %v475 = vpop.xlane.xlu0 %474
  %v476 = vsel %vm81, %v406, 0.0
  %477 = vadd.xlane.f32.xlu0 %v476
  %v478 = vpop.xlane.xlu0 %477
  %v479 = vsel %vm81, %v407, 0.0
  %480 = vadd.xlane.f32.xlu0 %v479
  %v481 = vpop.xlane.xlu0 %480
  %v482 = vsel %vm81, %v408, 0.0
  %483 = vadd.xlane.f32.xlu0 %v482
  %v484 = vpop.xlane.xlu0 %483
  %v485 = vsel %vm81, %v409, 0.0
  %486 = vadd.xlane.f32.xlu0 %v485
  %v487 = vpop.xlane.xlu0 %486
  %v488 = vsel %vm81, %v410, 0.0
  %489 = vadd.xlane.f32.xlu0 %v488
  %v490 = vpop.xlane.xlu0 %489
  %v491 = vsel %vm81, %v411, 0.0
  %492 = vadd.xlane.f32.xlu0 %v491
  %v493 = vpop.xlane.xlu0 %492
  %v494 = vsel %vm81, %v412, 0.0
  %495 = vadd.xlane.f32.xlu0 %v494
  %v496 = vpop.xlane.xlu0 %495
  %v497 = vsel %vm81, %v413, 0.0
  %498 = vadd.xlane.f32.xlu0 %v497
  %v499 = vpop.xlane.xlu0 %498
  %v500 = vsel %vm81, %v414, 0.0
  %501 = vadd.xlane.f32.xlu0 %v500
  %v502 = vpop.xlane.xlu0 %501
  %v503 = vsel %vm81, %v415, 0.0
  %504 = vadd.xlane.f32.xlu0 %v503
  %v505 = vpop.xlane.xlu0 %504
  %v506 = vsel %vm81, %v416, 0.0
  %507 = vadd.xlane.f32.xlu0 %v506
  %v508 = vpop.xlane.xlu0 %507
  %v509 = vsel %vm81, %v417, 0.0
  %510 = vadd.xlane.f32.xlu0 %v509
  %v511 = vpop.xlane.xlu0 %510
  %v512 = vsel %vm81, %v418, 0.0
  %513 = vadd.xlane.f32.xlu0 %v512
  %v514 = vpop.xlane.xlu0 %513
  %v515 = vsel %vm81, %v419, 0.0
  %516 = vadd.xlane.f32.xlu0 %v515
  %v517 = vpop.xlane.xlu0 %516
  %v518 = vsel %vm81, %v420, 0.0
  %519 = vadd.xlane.f32.xlu0 %v518
  %v520 = vpop.xlane.xlu0 %519
  %v521 = vsel %vm81, %v421, 0.0
  %522 = vadd.xlane.f32.xlu0 %v521
  %v523 = vpop.xlane.xlu0 %522
  %v524 = vsel %vm81, %v422, 0.0
  %525 = vadd.xlane.f32.xlu0 %v524
  %v526 = vpop.xlane.xlu0 %525
  %v527 = vsel %vm81, %v423, 0.0
  %528 = vadd.xlane.f32.xlu0 %v527
  %v529 = vpop.xlane.xlu0 %528
  %v530 = vsel %vm81, %v424, 0.0
  %531 = vadd.xlane.f32.xlu0 %v530
  %v532 = vpop.xlane.xlu0 %531
  %v533 = vsel %vm81, %v425, 0.0
  %534 = vadd.xlane.f32.xlu0 %v533
  %v535 = vpop.xlane.xlu0 %534
  %v536 = vsel %vm81, %v426, 0.0
  %537 = vadd.xlane.f32.xlu0 %v536
  %v538 = vpop.xlane.xlu0 %537
  %v539 = vsel %vm81, %v427, 0.0
  %540 = vadd.xlane.f32.xlu0 %v539
  %v541 = vpop.xlane.xlu0 %540
  %v542 = vsel %vm81, %v428, 0.0
  %543 = vadd.xlane.f32.xlu0 %v542
  %v544 = vpop.xlane.xlu0 %543
  %v545 = vsel %vm81, %v429, 0.0
  %546 = vadd.xlane.f32.xlu0 %v545
  %v547 = vpop.xlane.xlu0 %546
  %v548 = vsel %vm81, %v430, 0.0
  %549 = vadd.xlane.f32.xlu0 %v548
  %v550 = vpop.xlane.xlu0 %549
  %v551 = vsel %vm81, %v431, 0.0
  %552 = vadd.xlane.f32.xlu0 %v551
  %v553 = vpop.xlane.xlu0 %552
  %v554 = vsel %vm81, %v432, 0.0
  %555 = vadd.xlane.f32.xlu0 %v554
  %v556 = vpop.xlane.xlu0 %555
  %v557 = vsel %vm81, %v433, 0.0
  %558 = vadd.xlane.f32.xlu0 %v557
  %v559 = vpop.xlane.xlu0 %558
  %v560 = vsel %vm81, %v434, 0.0
  %561 = vadd.xlane.f32.xlu0 %v560
  %v562 = vpop.xlane.xlu0 %561
  %v563 = vsel %vm81, %v435, 0.0
  %564 = vadd.xlane.f32.xlu0 %v563
  %v565 = vpop.xlane.xlu0 %564
  %v566 = vsel %vm81, %v436, 0.0
  %567 = vadd.xlane.f32.xlu0 %v566
  %v568 = vpop.xlane.xlu0 %567
  %v569 = vsel %vm81, %v437, 0.0
  %570 = vadd.xlane.f32.xlu0 %v569
  %v571 = vpop.xlane.xlu0 %570
  %v572 = vsel %vm81, %v438, 0.0
  %573 = vadd.xlane.f32.xlu0 %v572
  %v574 = vpop.xlane.xlu0 %573
  %v575 = vsel %vm81, %v439, 0.0
  %576 = vadd.xlane.f32.xlu0 %v575
  %v577 = vpop.xlane.xlu0 %576
  %v578 = vsel %vm81, %v440, 0.0
  %579 = vadd.xlane.f32.xlu0 %v578
  %v580 = vpop.xlane.xlu0 %579
  %v581 = vsel %vm81, %v441, 0.0
  %582 = vadd.xlane.f32.xlu0 %v581
  %v583 = vpop.xlane.xlu0 %582
  %v584 = vsel %vm81, %v442, 0.0
  %585 = vadd.xlane.f32.xlu0 %v584
  %v586 = vpop.xlane.xlu0 %585
  %v587 = vsel %vm81, %v443, 0.0
  %588 = vadd.xlane.f32.xlu0 %v587
  %v589 = vpop.xlane.xlu0 %588
  %v590 = vsel %vm81, %v444, 0.0
  %591 = vadd.xlane.f32.xlu0 %v590
  %v592 = vpop.xlane.xlu0 %591
  %v593 = vsel %vm81, %v445, 0.0
  %594 = vadd.xlane.f32.xlu0 %v593
  %v595 = vpop.xlane.xlu0 %594
  %v596 = vsel %vm81, %v446, 0.0
  %597 = vadd.xlane.f32.xlu0 %v596
  %v598 = vpop.xlane.xlu0 %597
  %v599 = vsel %vm81, %v447, 0.0
  %600 = vadd.xlane.f32.xlu0 %v599
  %v601 = vpop.xlane.xlu0 %600
  %v602 = vsel %vm81, %v448, 0.0
  %603 = vadd.xlane.f32.xlu0 %v602
  %v604 = vpop.xlane.xlu0 %603
  %v605 = vsel %vm81, %v449, 0.0
  %606 = vadd.xlane.f32.xlu0 %v605
  %v607 = vpop.xlane.xlu0 %606
  %v608 = vsel %vm81, %v450, 0.0
  %609 = vadd.xlane.f32.xlu0 %v608
  %v610 = vpop.xlane.xlu0 %609
  %v611 = vsel %vm81, %v451, 0.0
  %612 = vadd.xlane.f32.xlu0 %v611
  %v613 = vpop.xlane.xlu0 %612
  %v614 = vsel %vm81, %v452, 0.0
  %615 = vadd.xlane.f32.xlu0 %v614
  %v616 = vpop.xlane.xlu0 %615
  %v617 = vsel %vm81, %v453, 0.0
  %618 = vadd.xlane.f32.xlu0 %v617
  %v619 = vpop.xlane.xlu0 %618
  %v620 = vsel %vm81, %v454, 0.0
  %621 = vadd.xlane.f32.xlu0 %v620
  %v622 = vpop.xlane.xlu0 %621
  %v623 = vsel %vm81, %v455, 0.0
  %624 = vadd.xlane.f32.xlu0 %v623
  %v625 = vpop.xlane.xlu0 %624
  %v626 = vsel %vm81, %v456, 0.0
  %627 = vadd.xlane.f32.xlu0 %v626
  %v628 = vpop.xlane.xlu0 %627
  %v629 = vsel %vm81, %v457, 0.0
  %630 = vadd.xlane.f32.xlu0 %v629
  %v631 = vpop.xlane.xlu0 %630
  %v632 = vsel %vm81, %v458, 0.0
  %633 = vadd.xlane.f32.xlu0 %v632
  %v634 = vpop.xlane.xlu0 %633
  %v635 = vsel %vm81, %v459, 0.0
  %636 = vadd.xlane.f32.xlu0 %v635
  %v637 = vpop.xlane.xlu0 %636
  %v638 = vsel %vm81, %v460, 0.0
  %639 = vadd.xlane.f32.xlu0 %v638
  %v640 = vpop.xlane.xlu0 %639
  %v641 = vsel %vm81, %v461, 0.0
  %642 = vadd.xlane.f32.xlu0 %v641
  %v643 = vpop.xlane.xlu0 %642
  %v644 = vsel %vm81, %v462, 0.0
  %645 = vadd.xlane.f32.xlu0 %v644
  %v646 = vpop.xlane.xlu0 %645
  %v647 = vsel %vm81, %v463, 0.0
  %648 = vadd.xlane.f32.xlu0 %v647
  %v649 = vpop.xlane.xlu0 %648
  %v650 = vsel %vm81, %v464, 0.0
  %651 = vadd.xlane.f32.xlu0 %v650
  %v652 = vpop.xlane.xlu0 %651
  %v653 = vsel %vm81, %v465, 0.0
  %654 = vadd.xlane.f32.xlu0 %v653
  %v655 = vpop.xlane.xlu0 %654
  %v656 = vsel %vm81, %v466, 0.0
  %657 = vadd.xlane.f32.xlu0 %v656
  %v658 = vpop.xlane.xlu0 %657
  %v659 = vmul.f32 %v469, %v274
  %v660 = vmul.f32 %v472, %v274
  %v661 = vmul.f32 %v475, %v274
  %v662 = vmul.f32 %v478, %v274
  %v663 = vmul.f32 %v481, %v274
  %v664 = vmul.f32 %v484, %v274
  %v665 = vmul.f32 %v487, %v274
  %v666 = vmul.f32 %v490, %v274
  %v667 = vmul.f32 %v493, %v274
  %v668 = vmul.f32 %v496, %v274
  %v669 = vmul.f32 %v499, %v274
  %v670 = vmul.f32 %v502, %v274
  %v671 = vmul.f32 %v505, %v274
  %v672 = vmul.f32 %v508, %v274
  %v673 = vmul.f32 %v511, %v274
  %v674 = vmul.f32 %v514, %v274
  %v675 = vmul.f32 %v517, %v274
  %v676 = vmul.f32 %v520, %v274
  %v677 = vmul.f32 %v523, %v274
  %v678 = vmul.f32 %v526, %v274
  %v679 = vmul.f32 %v529, %v274
  %v680 = vmul.f32 %v532, %v274
  %v681 = vmul.f32 %v535, %v274
  %v682 = vmul.f32 %v538, %v274
  %v683 = vmul.f32 %v541, %v274
  %v684 = vmul.f32 %v544, %v274
  %v685 = vmul.f32 %v547, %v274
  %v686 = vmul.f32 %v550, %v274
  %v687 = vmul.f32 %v553, %v274
  %v688 = vmul.f32 %v556, %v274
  %v689 = vmul.f32 %v559, %v274
  %v690 = vmul.f32 %v562, %v274
  %v691 = vmul.f32 %v565, %v274
  %v692 = vmul.f32 %v568, %v274
  %v693 = vmul.f32 %v571, %v274
  %v694 = vmul.f32 %v574, %v274
  %v695 = vmul.f32 %v577, %v274
  %v696 = vmul.f32 %v580, %v274
  %v697 = vmul.f32 %v583, %v274
  %v698 = vmul.f32 %v586, %v274
  %v699 = vmul.f32 %v589, %v274
  %v700 = vmul.f32 %v592, %v274
  %v701 = vmul.f32 %v595, %v274
  %v702 = vmul.f32 %v598, %v274
  %v703 = vmul.f32 %v601, %v274
  %v704 = vmul.f32 %v604, %v274
  %v705 = vmul.f32 %v607, %v274
  %v706 = vmul.f32 %v610, %v274
  %v707 = vmul.f32 %v613, %v274
  %v708 = vmul.f32 %v616, %v274
  %v709 = vmul.f32 %v619, %v274
  %v710 = vmul.f32 %v622, %v274
  %v711 = vmul.f32 %v625, %v274
  %v712 = vmul.f32 %v628, %v274
  %v713 = vmul.f32 %v631, %v274
  %v714 = vmul.f32 %v634, %v274
  %v715 = vmul.f32 %v637, %v274
  %v716 = vmul.f32 %v640, %v274
  %v717 = vmul.f32 %v643, %v274
  %v718 = vmul.f32 %v646, %v274
  %v719 = vmul.f32 %v649, %v274
  %v720 = vmul.f32 %v652, %v274
  %v721 = vmul.f32 %v655, %v274
  %v722 = vmul.f32 %v658, %v274
  %v723 = vadd.f32 %v659, 1e-05
  %v724 = vadd.f32 %v660, 1e-05
  %v725 = vadd.f32 %v661, 1e-05
  %v726 = vadd.f32 %v662, 1e-05
  %v727 = vadd.f32 %v663, 1e-05
  %v728 = vadd.f32 %v664, 1e-05
  %v729 = vadd.f32 %v665, 1e-05
  %v730 = vadd.f32 %v666, 1e-05
  %v731 = vadd.f32 %v667, 1e-05
  %v732 = vadd.f32 %v668, 1e-05
  %v733 = vadd.f32 %v669, 1e-05
  %v734 = vadd.f32 %v670, 1e-05
  %v735 = vadd.f32 %v671, 1e-05
  %v736 = vadd.f32 %v672, 1e-05
  %v737 = vadd.f32 %v673, 1e-05
  %v738 = vadd.f32 %v674, 1e-05
  %v739 = vadd.f32 %v675, 1e-05
  %v740 = vadd.f32 %v676, 1e-05
  %v741 = vadd.f32 %v677, 1e-05
  %v742 = vadd.f32 %v678, 1e-05
  %v743 = vadd.f32 %v679, 1e-05
  %v744 = vadd.f32 %v680, 1e-05
  %v745 = vadd.f32 %v681, 1e-05
  %v746 = vadd.f32 %v682, 1e-05
  %v747 = vadd.f32 %v683, 1e-05
  %v748 = vadd.f32 %v684, 1e-05
  %v749 = vadd.f32 %v685, 1e-05
  %v750 = vadd.f32 %v686, 1e-05
  %v751 = vadd.f32 %v687, 1e-05
  %v752 = vadd.f32 %v688, 1e-05
  %v753 = vadd.f32 %v689, 1e-05
  %v754 = vadd.f32 %v690, 1e-05
  %v755 = vadd.f32 %v691, 1e-05
  %v756 = vadd.f32 %v692, 1e-05
  %v757 = vadd.f32 %v693, 1e-05
  %v758 = vadd.f32 %v694, 1e-05
  %v759 = vadd.f32 %v695, 1e-05
  %v760 = vadd.f32 %v696, 1e-05
  %v761 = vadd.f32 %v697, 1e-05
  %v762 = vadd.f32 %v698, 1e-05
  %v763 = vadd.f32 %v699, 1e-05
  %v764 = vadd.f32 %v700, 1e-05
  %v765 = vadd.f32 %v701, 1e-05
  %v766 = vadd.f32 %v702, 1e-05
  %v767 = vadd.f32 %v703, 1e-05
  %v768 = vadd.f32 %v704, 1e-05
  %v769 = vadd.f32 %v705, 1e-05
  %v770 = vadd.f32 %v706, 1e-05
  %v771 = vadd.f32 %v707, 1e-05
  %v772 = vadd.f32 %v708, 1e-05
  %v773 = vadd.f32 %v709, 1e-05
  %v774 = vadd.f32 %v710, 1e-05
  %v775 = vadd.f32 %v711, 1e-05
  %v776 = vadd.f32 %v712, 1e-05
  %v777 = vadd.f32 %v713, 1e-05
  %v778 = vadd.f32 %v714, 1e-05
  %v779 = vadd.f32 %v715, 1e-05
  %v780 = vadd.f32 %v716, 1e-05
  %v781 = vadd.f32 %v717, 1e-05
  %v782 = vadd.f32 %v718, 1e-05
  %v783 = vadd.f32 %v719, 1e-05
  %v784 = vadd.f32 %v720, 1e-05
  %v785 = vadd.f32 %v721, 1e-05
  %v786 = vadd.f32 %v722, 1e-05
  %v787 = vrsqrt.pop %v723
  %v788 = vrsqrt.pop %v724
  %v789 = vrsqrt.pop %v725
  %v790 = vrsqrt.pop %v726
  %v791 = vrsqrt.pop %v727
  %v792 = vrsqrt.pop %v728
  %v793 = vrsqrt.pop %v729
  %v794 = vrsqrt.pop %v730
  %v795 = vrsqrt.pop %v731
  %v796 = vrsqrt.pop %v732
  %v797 = vrsqrt.pop %v733
  %v798 = vrsqrt.pop %v734
  %v799 = vrsqrt.pop %v735
  %v800 = vrsqrt.pop %v736
  %v801 = vrsqrt.pop %v737
  %v802 = vrsqrt.pop %v738
  %v803 = vrsqrt.pop %v739
  %v804 = vrsqrt.pop %v740
  %v805 = vrsqrt.pop %v741
  %v806 = vrsqrt.pop %v742
  %v807 = vrsqrt.pop %v743
  %v808 = vrsqrt.pop %v744
  %v809 = vrsqrt.pop %v745
  %v810 = vrsqrt.pop %v746
  %v811 = vrsqrt.pop %v747
  %v812 = vrsqrt.pop %v748
  %v813 = vrsqrt.pop %v749
  %v814 = vrsqrt.pop %v750
  %v815 = vrsqrt.pop %v751
  %v816 = vrsqrt.pop %v752
  %v817 = vrsqrt.pop %v753
  %v818 = vrsqrt.pop %v754
  %v819 = vrsqrt.pop %v755
  %v820 = vrsqrt.pop %v756
  %v821 = vrsqrt.pop %v757
  %v822 = vrsqrt.pop %v758
  %v823 = vrsqrt.pop %v759
  %v824 = vrsqrt.pop %v760
  %v825 = vrsqrt.pop %v761
  %v826 = vrsqrt.pop %v762
  %v827 = vrsqrt.pop %v763
  %v828 = vrsqrt.pop %v764
  %v829 = vrsqrt.pop %v765
  %v830 = vrsqrt.pop %v766
  %v831 = vrsqrt.pop %v767
  %v832 = vrsqrt.pop %v768
  %v833 = vrsqrt.pop %v769
  %v834 = vrsqrt.pop %v770
  %v835 = vrsqrt.pop %v771
  %v836 = vrsqrt.pop %v772
  %v837 = vrsqrt.pop %v773
  %v838 = vrsqrt.pop %v774
  %v839 = vrsqrt.pop %v775
  %v840 = vrsqrt.pop %v776
  %v841 = vrsqrt.pop %v777
  %v842 = vrsqrt.pop %v778
  %v843 = vrsqrt.pop %v779
  %v844 = vrsqrt.pop %v780
  %v845 = vrsqrt.pop %v781
  %v846 = vrsqrt.pop %v782
  %v847 = vrsqrt.pop %v783
  %v848 = vrsqrt.pop %v784
  %v849 = vrsqrt.pop %v785
  %v850 = vrsqrt.pop %v786
  %v851 = vmul.f32 %v339, %v787
  %v852 = vmul.f32 %v340, %v788
  %v853 = vmul.f32 %v341, %v789
  %v854 = vmul.f32 %v342, %v790
  %v855 = vmul.f32 %v343, %v791
  %v856 = vmul.f32 %v344, %v792
  %v857 = vmul.f32 %v345, %v793
  %v858 = vmul.f32 %v346, %v794
  %v859 = vmul.f32 %v347, %v795
  %v860 = vmul.f32 %v348, %v796
  %v861 = vmul.f32 %v349, %v797
  %v862 = vmul.f32 %v350, %v798
  %v863 = vmul.f32 %v351, %v799
  %v864 = vmul.f32 %v352, %v800
  %v865 = vmul.f32 %v353, %v801
  %v866 = vmul.f32 %v354, %v802
  %v867 = vmul.f32 %v355, %v803
  %v868 = vmul.f32 %v356, %v804
  %v869 = vmul.f32 %v357, %v805
  %v870 = vmul.f32 %v358, %v806
  %v871 = vmul.f32 %v359, %v807
  %v872 = vmul.f32 %v360, %v808
  %v873 = vmul.f32 %v361, %v809
  %v874 = vmul.f32 %v362, %v810
  %v875 = vmul.f32 %v363, %v811
  %v876 = vmul.f32 %v364, %v812
  %v877 = vmul.f32 %v365, %v813
  %v878 = vmul.f32 %v366, %v814
  %v879 = vmul.f32 %v367, %v815
  %v880 = vmul.f32 %v368, %v816
  %v881 = vmul.f32 %v369, %v817
  %v882 = vmul.f32 %v370, %v818
  %v883 = vmul.f32 %v371, %v819
  %v884 = vmul.f32 %v372, %v820
  %v885 = vmul.f32 %v373, %v821
  %v886 = vmul.f32 %v374, %v822
  %v887 = vmul.f32 %v375, %v823
  %v888 = vmul.f32 %v376, %v824
  %v889 = vmul.f32 %v377, %v825
  %v890 = vmul.f32 %v378, %v826
  %v891 = vmul.f32 %v379, %v827
  %v892 = vmul.f32 %v380, %v828
  %v893 = vmul.f32 %v381, %v829
  %v894 = vmul.f32 %v382, %v830
  %v895 = vmul.f32 %v383, %v831
  %v896 = vmul.f32 %v384, %v832
  %v897 = vmul.f32 %v385, %v833
  %v898 = vmul.f32 %v386, %v834
  %v899 = vmul.f32 %v387, %v835
  %v900 = vmul.f32 %v388, %v836
  %v901 = vmul.f32 %v389, %v837
  %v902 = vmul.f32 %v390, %v838
  %v903 = vmul.f32 %v391, %v839
  %v904 = vmul.f32 %v392, %v840
  %v905 = vmul.f32 %v393, %v841
  %v906 = vmul.f32 %v394, %v842
  %v907 = vmul.f32 %v395, %v843
  %v908 = vmul.f32 %v396, %v844
  %v909 = vmul.f32 %v397, %v845
  %v910 = vmul.f32 %v398, %v846
  %v911 = vmul.f32 %v399, %v847
  %v912 = vmul.f32 %v400, %v848
  %v913 = vmul.f32 %v401, %v849
  %v914 = vmul.f32 %v402, %v850
  %v915 = vld [vmem:[%s1] sm:$0x1]
  %v917 = vlaneseq
  %v918 = vshrl.u32 %v917, 7
  %v919 = vsub.s32 0, %v918
  %v920 = vrot.slane %v915, %v919
  %v922 = vmul.f32 %v851, %v920
  %v923 = vmul.f32 %v852, %v920
  %v924 = vmul.f32 %v853, %v920
  %v925 = vmul.f32 %v854, %v920
  %v926 = vmul.f32 %v855, %v920
  %v927 = vmul.f32 %v856, %v920
  %v928 = vmul.f32 %v857, %v920
  %v929 = vmul.f32 %v858, %v920
  %v930 = vmul.f32 %v859, %v920
  %v931 = vmul.f32 %v860, %v920
  %v932 = vmul.f32 %v861, %v920
  %v933 = vmul.f32 %v862, %v920
  %v934 = vmul.f32 %v863, %v920
  %v935 = vmul.f32 %v864, %v920
  %v936 = vmul.f32 %v865, %v920
  %v937 = vmul.f32 %v866, %v920
  %v938 = vmul.f32 %v867, %v920
  %v939 = vmul.f32 %v868, %v920
  %v940 = vmul.f32 %v869, %v920
  %v941 = vmul.f32 %v870, %v920
  %v942 = vmul.f32 %v871, %v920
  %v943 = vmul.f32 %v872, %v920
  %v944 = vmul.f32 %v873, %v920
  %v945 = vmul.f32 %v874, %v920
  %v946 = vmul.f32 %v875, %v920
  %v947 = vmul.f32 %v876, %v920
  %v948 = vmul.f32 %v877, %v920
  %v949 = vmul.f32 %v878, %v920
  %v950 = vmul.f32 %v879, %v920
  %v951 = vmul.f32 %v880, %v920
  %v952 = vmul.f32 %v881, %v920
  %v953 = vmul.f32 %v882, %v920
  %v954 = vmul.f32 %v883, %v920
  %v955 = vmul.f32 %v884, %v920
  %v956 = vmul.f32 %v885, %v920
  %v957 = vmul.f32 %v886, %v920
  %v958 = vmul.f32 %v887, %v920
  %v959 = vmul.f32 %v888, %v920
  %v960 = vmul.f32 %v889, %v920
  %v961 = vmul.f32 %v890, %v920
  %v962 = vmul.f32 %v891, %v920
  %v963 = vmul.f32 %v892, %v920
  %v964 = vmul.f32 %v893, %v920
  %v965 = vmul.f32 %v894, %v920
  %v966 = vmul.f32 %v895, %v920
  %v967 = vmul.f32 %v896, %v920
  %v968 = vmul.f32 %v897, %v920
  %v969 = vmul.f32 %v898, %v920
  %v970 = vmul.f32 %v899, %v920
  %v971 = vmul.f32 %v900, %v920
  %v972 = vmul.f32 %v901, %v920
  %v973 = vmul.f32 %v902, %v920
  %v974 = vmul.f32 %v903, %v920
  %v975 = vmul.f32 %v904, %v920
  %v976 = vmul.f32 %v905, %v920
  %v977 = vmul.f32 %v906, %v920
  %v978 = vmul.f32 %v907, %v920
  %v979 = vmul.f32 %v908, %v920
  %v980 = vmul.f32 %v909, %v920
  %v981 = vmul.f32 %v910, %v920
  %v982 = vmul.f32 %v911, %v920
  %v983 = vmul.f32 %v912, %v920
  %v984 = vmul.f32 %v913, %v920
  %v985 = vmul.f32 %v914, %v920
  %v986 = vld [vmem:[%s2] sm:$0x1]
  %v988 = vlaneseq
  %v989 = vshrl.u32 %v988, 7
  %v990 = vsub.s32 0, %v989
  %v991 = vrot.slane %v986, %v990
  %v993 = vadd.f32 %v922, %v991
  %v994 = vadd.f32 %v923, %v991
  %v995 = vadd.f32 %v924, %v991
  %v996 = vadd.f32 %v925, %v991
  %v997 = vadd.f32 %v926, %v991
  %v998 = vadd.f32 %v927, %v991
  %v999 = vadd.f32 %v928, %v991
  %v1000 = vadd.f32 %v929, %v991
  %v1001 = vadd.f32 %v930, %v991
  %v1002 = vadd.f32 %v931, %v991
  %v1003 = vadd.f32 %v932, %v991
  %v1004 = vadd.f32 %v933, %v991
  %v1005 = vadd.f32 %v934, %v991
  %v1006 = vadd.f32 %v935, %v991
  %v1007 = vadd.f32 %v936, %v991
  %v1008 = vadd.f32 %v937, %v991
  %v1009 = vadd.f32 %v938, %v991
  %v1010 = vadd.f32 %v939, %v991
  %v1011 = vadd.f32 %v940, %v991
  %v1012 = vadd.f32 %v941, %v991
  %v1013 = vadd.f32 %v942, %v991
  %v1014 = vadd.f32 %v943, %v991
  %v1015 = vadd.f32 %v944, %v991
  %v1016 = vadd.f32 %v945, %v991
  %v1017 = vadd.f32 %v946, %v991
  %v1018 = vadd.f32 %v947, %v991
  %v1019 = vadd.f32 %v948, %v991
  %v1020 = vadd.f32 %v949, %v991
  %v1021 = vadd.f32 %v950, %v991
  %v1022 = vadd.f32 %v951, %v991
  %v1023 = vadd.f32 %v952, %v991
  %v1024 = vadd.f32 %v953, %v991
  %v1025 = vadd.f32 %v954, %v991
  %v1026 = vadd.f32 %v955, %v991
  %v1027 = vadd.f32 %v956, %v991
  %v1028 = vadd.f32 %v957, %v991
  %v1029 = vadd.f32 %v958, %v991
  %v1030 = vadd.f32 %v959, %v991
  %v1031 = vadd.f32 %v960, %v991
  %v1032 = vadd.f32 %v961, %v991
  %v1033 = vadd.f32 %v962, %v991
  %v1034 = vadd.f32 %v963, %v991
  %v1035 = vadd.f32 %v964, %v991
  %v1036 = vadd.f32 %v965, %v991
  %v1037 = vadd.f32 %v966, %v991
  %v1038 = vadd.f32 %v967, %v991
  %v1039 = vadd.f32 %v968, %v991
  %v1040 = vadd.f32 %v969, %v991
  %v1041 = vadd.f32 %v970, %v991
  %v1042 = vadd.f32 %v971, %v991
  %v1043 = vadd.f32 %v972, %v991
  %v1044 = vadd.f32 %v973, %v991
  %v1045 = vadd.f32 %v974, %v991
  %v1046 = vadd.f32 %v975, %v991
  %v1047 = vadd.f32 %v976, %v991
  %v1048 = vadd.f32 %v977, %v991
  %v1049 = vadd.f32 %v978, %v991
  %v1050 = vadd.f32 %v979, %v991
  %v1051 = vadd.f32 %v980, %v991
  %v1052 = vadd.f32 %v981, %v991
  %v1053 = vadd.f32 %v982, %v991
  %v1054 = vadd.f32 %v983, %v991
  %v1055 = vadd.f32 %v984, %v991
  %v1056 = vadd.f32 %v985, %v991
  %v1057 = vld [vmem:[%s3] sm:$0xff]
  %v1058 = vld [vmem:[%s3 + $0x8] sm:$0xff]
  %v1060 = vsel %vm81, %v993, 0
  %v1063 = vsel %vm81, %v994, 0
  %v1066 = vsel %vm81, %v995, 0
  %v1069 = vsel %vm81, %v996, 0
  %v1072 = vsel %vm81, %v997, 0
  %v1075 = vsel %vm81, %v998, 0
  %v1078 = vsel %vm81, %v999, 0
  %v1081 = vsel %vm81, %v1000, 0
  %v1084 = vsel %vm81, %v1001, 0
  %v1087 = vsel %vm81, %v1002, 0
  %v1090 = vsel %vm81, %v1003, 0
  %v1093 = vsel %vm81, %v1004, 0
  %v1096 = vsel %vm81, %v1005, 0
  %v1099 = vsel %vm81, %v1006, 0
  %v1102 = vsel %vm81, %v1007, 0
  %v1105 = vsel %vm81, %v1008, 0
  %v1108 = vsel %vm81, %v1009, 0
  %v1111 = vsel %vm81, %v1010, 0
  %v1114 = vsel %vm81, %v1011, 0
  %v1117 = vsel %vm81, %v1012, 0
  %v1120 = vsel %vm81, %v1013, 0
  %v1123 = vsel %vm81, %v1014, 0
  %v1126 = vsel %vm81, %v1015, 0
  %v1129 = vsel %vm81, %v1016, 0
  %v1132 = vsel %vm81, %v1017, 0
  %v1135 = vsel %vm81, %v1018, 0
  %v1138 = vsel %vm81, %v1019, 0
  %v1141 = vsel %vm81, %v1020, 0
  %v1144 = vsel %vm81, %v1021, 0
  %v1147 = vsel %vm81, %v1022, 0
  %v1150 = vsel %vm81, %v1023, 0
  %v1153 = vsel %vm81, %v1024, 0
  %v1156 = vsel %vm81, %v1025, 0
  %v1159 = vsel %vm81, %v1026, 0
  %v1162 = vsel %vm81, %v1027, 0
  %v1165 = vsel %vm81, %v1028, 0
  %v1168 = vsel %vm81, %v1029, 0
  %v1171 = vsel %vm81, %v1030, 0
  %v1174 = vsel %vm81, %v1031, 0
  %v1177 = vsel %vm81, %v1032, 0
  %v1180 = vsel %vm81, %v1033, 0
  %v1183 = vsel %vm81, %v1034, 0
  %v1186 = vsel %vm81, %v1035, 0
  %v1189 = vsel %vm81, %v1036, 0
  %v1192 = vsel %vm81, %v1037, 0
  %v1195 = vsel %vm81, %v1038, 0
  %v1198 = vsel %vm81, %v1039, 0
  %v1201 = vsel %vm81, %v1040, 0
  %v1204 = vsel %vm81, %v1041, 0
  %v1207 = vsel %vm81, %v1042, 0
  %v1210 = vsel %vm81, %v1043, 0
  %v1213 = vsel %vm81, %v1044, 0
  %v1216 = vsel %vm81, %v1045, 0
  %v1219 = vsel %vm81, %v1046, 0
  %v1222 = vsel %vm81, %v1047, 0
  %v1225 = vsel %vm81, %v1048, 0
  %v1228 = vsel %vm81, %v1049, 0
  %v1231 = vsel %vm81, %v1050, 0
  %v1234 = vsel %vm81, %v1051, 0
  %v1237 = vsel %vm81, %v1052, 0
  %v1240 = vsel %vm81, %v1053, 0
  %v1243 = vsel %vm81, %v1054, 0
  %v1246 = vsel %vm81, %v1055, 0
  %v1249 = vsel %vm81, %v1056, 0
  %1251 = vmatprep.subr.mxu0 0.0
  %1252 = vmatpush1.msra.mxu0 %v1057
  %1253 = vmatprep.subr.mxu0 0.0
  %1254 = vmatpush1.msra.mxu0 %v1058
  %1255 = vmatprep.subr.mxu0 0.0
  %1256 = vmatpush1.msra.mxu0 0.0
  %1257 = vmatprep.subr.mxu0 0.0
  %1258 = vmatpush1.msra.mxu0 0.0
  %1259 = vmatprep.subr.mxu0 0.0
  %1260 = vmatpush1.msra.mxu0 0.0
  %1261 = vmatprep.subr.mxu0 0.0
  %1262 = vmatpush1.msra.mxu0 0.0
  %1263 = vmatprep.subr.mxu0 0.0
  %1264 = vmatpush1.msra.mxu0 0.0
  %1265 = vmatprep.subr.mxu0 0.0
  %1266 = vmatpush1.msra.mxu0 0.0
  %1267 = vmatprep.subr.mxu0 0.0
  %1268 = vmatpush1.msra.mxu0 0.0
  %1269 = vmatprep.subr.mxu0 0.0
  %1270 = vmatpush1.msra.mxu0 0.0
  %1271 = vmatprep.subr.mxu0 0.0
  %1272 = vmatpush1.msra.mxu0 0.0
  %1273 = vmatprep.subr.mxu0 0.0
  %1274 = vmatpush1.msra.mxu0 0.0
  %1275 = vmatprep.subr.mxu0 0.0
  %1276 = vmatpush1.msra.mxu0 0.0
  %1277 = vmatprep.subr.mxu0 0.0
  %1278 = vmatpush1.msra.mxu0 0.0
  %1279 = vmatprep.subr.mxu0 0.0
  %1280 = vmatpush1.msra.mxu0 0.0
  %1281 = vmatprep.subr.mxu0 0.0
  %1282 = vmatpush1.msra.mxu0 0.0
  %1283 = vmatprep.subr.mxu0 0.0
  %1284 = vmatpush1.msra.mxu0 0.0
  %1285 = vmatprep.subr.mxu0 0.0
  %1286 = vmatpush1.msra.mxu0 0.0
  %1287 = vmatprep.subr.mxu0 0.0
  %1288 = vmatpush1.msra.mxu0 0.0
  %1289 = vmatprep.subr.mxu0 0.0
  %1290 = vmatpush1.msra.mxu0 0.0
  %1291 = vmatprep.subr.mxu0 0.0
  %1292 = vmatpush1.msra.mxu0 0.0
  %1293 = vmatprep.subr.mxu0 0.0
  %1294 = vmatpush1.msra.mxu0 0.0
  %1295 = vmatprep.subr.mxu0 0.0
  %1296 = vmatpush1.msra.mxu0 0.0
  %1297 = vmatprep.subr.mxu0 0.0
  %1298 = vmatpush1.msra.mxu0 0.0
  %1299 = vmatprep.subr.mxu0 0.0
  %1300 = vmatpush1.msra.mxu0 0.0
  %1301 = vmatprep.subr.mxu0 0.0
  %1302 = vmatpush1.msra.mxu0 0.0
  %1303 = vmatprep.subr.mxu0 0.0
  %1304 = vmatpush1.msra.mxu0 0.0
  %1305 = vmatprep.subr.mxu0 0.0
  %1306 = vmatpush1.msra.mxu0 0.0
  %1307 = vmatprep.subr.mxu0 0.0
  %1308 = vmatpush1.msra.mxu0 0.0
  %1309 = vmatprep.subr.mxu0 0.0
  %1310 = vmatpush1.msra.mxu0 0.0
  %1311 = vmatprep.subr.mxu0 0.0
  %1312 = vmatpush1.msra.mxu0 0.0
  %1313 = vmatprep.subr.mxu0 0.0
  %1314 = vmatpush1.msra.mxu0 0.0
  %1315 = vmatprep.mubr.f32.mxu0 0.0
  %1316 = vmatmul.mubr.f32.gmra.mrb[0].mxu0 %v1060
  %v1317 = vpop.f32.mrb[0].mxu0
  %v1318 = vadd.f32 0.0, %v1317
  %v1319 = vpop.f32.mrb[0].mxu0
  %1320 = vmatprep.mubr.f32.mxu0 0.0
  %1321 = vmatmul.mubr.f32.gmra.mrb[0].mxu0 %v1063
  %v1322 = vpop.f32.mrb[0].mxu0
  %v1323 = vadd.f32 0.0, %v1322
  %v1324 = vpop.f32.mrb[0].mxu0
  %1325 = vmatprep.mubr.f32.mxu0 0.0
  %1326 = vmatmul.mubr.f32.gmra.mrb[0].mxu0 %v1066
  %v1327 = vpop.f32.mrb[0].mxu0
  %v1328 = vadd.f32 0.0, %v1327
  %v1329 = vpop.f32.mrb[0].mxu0
  %1330 = vmatprep.mubr.f32.mxu0 0.0
  %1331 = vmatmul.mubr.f32.gmra.mrb[0].mxu0 %v1069
  %v1332 = vpop.f32.mrb[0].mxu0
  %v1333 = vadd.f32 0.0, %v1332
  %v1334 = vpop.f32.mrb[0].mxu0
  %1335 = vmatprep.mubr.f32.mxu0 0.0
  %1336 = vmatmul.mubr.f32.gmra.mrb[0].mxu0 %v1072
  %v1337 = vpop.f32.mrb[0].mxu0
  %v1338 = vadd.f32 0.0, %v1337
  %v1339 = vpop.f32.mrb[0].mxu0
  %1340 = vmatprep.mubr.f32.mxu0 0.0
  %1341 = vmatmul.mubr.f32.gmra.mrb[0].mxu0 %v1075
  %v1342 = vpop.f32.mrb[0].mxu0
  %v1343 = vadd.f32 0.0, %v1342
  %v1344 = vpop.f32.mrb[0].mxu0
  %1345 = vmatprep.mubr.f32.mxu0 0.0
  %1346 = vmatmul.mubr.f32.gmra.mrb[0].mxu0 %v1078
  %v1347 = vpop.f32.mrb[0].mxu0
  %v1348 = vadd.f32 0.0, %v1347
  %v1349 = vpop.f32.mrb[0].mxu0
  %1350 = vmatprep.mubr.f32.mxu0 0.0
  %1351 = vmatmul.mubr.f32.gmra.mrb[0].mxu0 %v1081
  %v1352 = vpop.f32.mrb[0].mxu0
  %v1353 = vadd.f32 0.0, %v1352
  %v1354 = vpop.f32.mrb[0].mxu0
  %1355 = vmatprep.mubr.f32.mxu0 0.0
  %1356 = vmatmul.mubr.f32.gmra.mrb[0].mxu0 %v1084
  %v1357 = vpop.f32.mrb[0].mxu0
  %v1358 = vadd.f32 0.0, %v1357
  %v1359 = vpop.f32.mrb[0].mxu0
  %1360 = vmatprep.mubr.f32.mxu0 0.0
  %1361 = vmatmul.mubr.f32.gmra.mrb[0].mxu0 %v1087
  %v1362 = vpop.f32.mrb[0].mxu0
  %v1363 = vadd.f32 0.0, %v1362
  %v1364 = vpop.f32.mrb[0].mxu0
  %1365 = vmatprep.mubr.f32.mxu0 0.0
  %1366 = vmatmul.mubr.f32.gmra.mrb[0].mxu0 %v1090
  %v1367 = vpop.f32.mrb[0].mxu0
  %v1368 = vadd.f32 0.0, %v1367
  %v1369 = vpop.f32.mrb[0].mxu0
  %1370 = vmatprep.mubr.f32.mxu0 0.0
  %1371 = vmatmul.mubr.f32.gmra.mrb[0].mxu0 %v1093
  %v1372 = vpop.f32.mrb[0].mxu0
  %v1373 = vadd.f32 0.0, %v1372
  %v1374 = vpop.f32.mrb[0].mxu0
  %1375 = vmatprep.mubr.f32.mxu0 0.0
  %1376 = vmatmul.mubr.f32.gmra.mrb[0].mxu0 %v1096
  %v1377 = vpop.f32.mrb[0].mxu0
  %v1378 = vadd.f32 0.0, %v1377
  %v1379 = vpop.f32.mrb[0].mxu0
  %1380 = vmatprep.mubr.f32.mxu0 0.0
  %1381 = vmatmul.mubr.f32.gmra.mrb[0].mxu0 %v1099
  %v1382 = vpop.f32.mrb[0].mxu0
  %v1383 = vadd.f32 0.0, %v1382
  %v1384 = vpop.f32.mrb[0].mxu0
  %1385 = vmatprep.mubr.f32.mxu0 0.0
  %1386 = vmatmul.mubr.f32.gmra.mrb[0].mxu0 %v1102
  %v1387 = vpop.f32.mrb[0].mxu0
  %v1388 = vadd.f32 0.0, %v1387
  %v1389 = vpop.f32.mrb[0].mxu0
  %1390 = vmatprep.mubr.f32.mxu0 0.0
  %1391 = vmatmul.mubr.f32.gmra.mrb[0].mxu0 %v1105
  %v1392 = vpop.f32.mrb[0].mxu0
  %v1393 = vadd.f32 0.0, %v1392
  %v1394 = vpop.f32.mrb[0].mxu0
  %1395 = vmatprep.mubr.f32.mxu0 0.0
  %1396 = vmatmul.mubr.f32.gmra.mrb[0].mxu0 %v1108
  %v1397 = vpop.f32.mrb[0].mxu0
  %v1398 = vadd.f32 0.0, %v1397
  %v1399 = vpop.f32.mrb[0].mxu0
  %1400 = vmatprep.mubr.f32.mxu0 0.0
  %1401 = vmatmul.mubr.f32.gmra.mrb[0].mxu0 %v1111
  %v1402 = vpop.f32.mrb[0].mxu0
  %v1403 = vadd.f32 0.0, %v1402
  %v1404 = vpop.f32.mrb[0].mxu0
  %1405 = vmatprep.mubr.f32.mxu0 0.0
  %1406 = vmatmul.mubr.f32.gmra.mrb[0].mxu0 %v1114
  %v1407 = vpop.f32.mrb[0].mxu0
  %v1408 = vadd.f32 0.0, %v1407
  %v1409 = vpop.f32.mrb[0].mxu0
  %1410 = vmatprep.mubr.f32.mxu0 0.0
  %1411 = vmatmul.mubr.f32.gmra.mrb[0].mxu0 %v1117
  %v1412 = vpop.f32.mrb[0].mxu0
  %v1413 = vadd.f32 0.0, %v1412
  %v1414 = vpop.f32.mrb[0].mxu0
  %1415 = vmatprep.mubr.f32.mxu0 0.0
  %1416 = vmatmul.mubr.f32.gmra.mrb[0].mxu0 %v1120
  %v1417 = vpop.f32.mrb[0].mxu0
  %v1418 = vadd.f32 0.0, %v1417
  %v1419 = vpop.f32.mrb[0].mxu0
  %1420 = vmatprep.mubr.f32.mxu0 0.0
  %1421 = vmatmul.mubr.f32.gmra.mrb[0].mxu0 %v1123
  %v1422 = vpop.f32.mrb[0].mxu0
  %v1423 = vadd.f32 0.0, %v1422
  %v1424 = vpop.f32.mrb[0].mxu0
  %1425 = vmatprep.mubr.f32.mxu0 0.0
  %1426 = vmatmul.mubr.f32.gmra.mrb[0].mxu0 %v1126
  %v1427 = vpop.f32.mrb[0].mxu0
  %v1428 = vadd.f32 0.0, %v1427
  %v1429 = vpop.f32.mrb[0].mxu0
  %1430 = vmatprep.mubr.f32.mxu0 0.0
  %1431 = vmatmul.mubr.f32.gmra.mrb[0].mxu0 %v1129
  %v1432 = vpop.f32.mrb[0].mxu0
  %v1433 = vadd.f32 0.0, %v1432
  %v1434 = vpop.f32.mrb[0].mxu0
  %1435 = vmatprep.mubr.f32.mxu0 0.0
  %1436 = vmatmul.mubr.f32.gmra.mrb[0].mxu0 %v1132
  %v1437 = vpop.f32.mrb[0].mxu0
  %v1438 = vadd.f32 0.0, %v1437
  %v1439 = vpop.f32.mrb[0].mxu0
  %1440 = vmatprep.mubr.f32.mxu0 0.0
  %1441 = vmatmul.mubr.f32.gmra.mrb[0].mxu0 %v1135
  %v1442 = vpop.f32.mrb[0].mxu0
  %v1443 = vadd.f32 0.0, %v1442
  %v1444 = vpop.f32.mrb[0].mxu0
  %1445 = vmatprep.mubr.f32.mxu0 0.0
  %1446 = vmatmul.mubr.f32.gmra.mrb[0].mxu0 %v1138
  %v1447 = vpop.f32.mrb[0].mxu0
  %v1448 = vadd.f32 0.0, %v1447
  %v1449 = vpop.f32.mrb[0].mxu0
  %1450 = vmatprep.mubr.f32.mxu0 0.0
  %1451 = vmatmul.mubr.f32.gmra.mrb[0].mxu0 %v1141
  %v1452 = vpop.f32.mrb[0].mxu0
  %v1453 = vadd.f32 0.0, %v1452
  %v1454 = vpop.f32.mrb[0].mxu0
  %1455 = vmatprep.mubr.f32.mxu0 0.0
  %1456 = vmatmul.mubr.f32.gmra.mrb[0].mxu0 %v1144
  %v1457 = vpop.f32.mrb[0].mxu0
  %v1458 = vadd.f32 0.0, %v1457
  %v1459 = vpop.f32.mrb[0].mxu0
  %1460 = vmatprep.mubr.f32.mxu0 0.0
  %1461 = vmatmul.mubr.f32.gmra.mrb[0].mxu0 %v1147
  %v1462 = vpop.f32.mrb[0].mxu0
  %v1463 = vadd.f32 0.0, %v1462
  %v1464 = vpop.f32.mrb[0].mxu0
  %1465 = vmatprep.mubr.f32.mxu0 0.0
  %1466 = vmatmul.mubr.f32.gmra.mrb[0].mxu0 %v1150
  %v1467 = vpop.f32.mrb[0].mxu0
  %v1468 = vadd.f32 0.0, %v1467
  %v1469 = vpop.f32.mrb[0].mxu0
  %1470 = vmatprep.mubr.f32.mxu0 0.0
  %1471 = vmatmul.mubr.f32.gmra.mrb[0].mxu0 %v1153
  %v1472 = vpop.f32.mrb[0].mxu0
  %v1473 = vadd.f32 0.0, %v1472
  %v1474 = vpop.f32.mrb[0].mxu0
  %1475 = vmatprep.mubr.f32.mxu0 0.0
  %1476 = vmatmul.mubr.f32.gmra.mrb[0].mxu0 %v1156
  %v1477 = vpop.f32.mrb[0].mxu0
  %v1478 = vadd.f32 0.0, %v1477
  %v1479 = vpop.f32.mrb[0].mxu0
  %1480 = vmatprep.mubr.f32.mxu0 0.0
  %1481 = vmatmul.mubr.f32.gmra.mrb[0].mxu0 %v1159
  %v1482 = vpop.f32.mrb[0].mxu0
  %v1483 = vadd.f32 0.0, %v1482
  %v1484 = vpop.f32.mrb[0].mxu0
  %1485 = vmatprep.mubr.f32.mxu0 0.0
  %1486 = vmatmul.mubr.f32.gmra.mrb[0].mxu0 %v1162
  %v1487 = vpop.f32.mrb[0].mxu0
  %v1488 = vadd.f32 0.0, %v1487
  %v1489 = vpop.f32.mrb[0].mxu0
  %1490 = vmatprep.mubr.f32.mxu0 0.0
  %1491 = vmatmul.mubr.f32.gmra.mrb[0].mxu0 %v1165
  %v1492 = vpop.f32.mrb[0].mxu0
  %v1493 = vadd.f32 0.0, %v1492
  %v1494 = vpop.f32.mrb[0].mxu0
  %1495 = vmatprep.mubr.f32.mxu0 0.0
  %1496 = vmatmul.mubr.f32.gmra.mrb[0].mxu0 %v1168
  %v1497 = vpop.f32.mrb[0].mxu0
  %v1498 = vadd.f32 0.0, %v1497
  %v1499 = vpop.f32.mrb[0].mxu0
  %1500 = vmatprep.mubr.f32.mxu0 0.0
  %1501 = vmatmul.mubr.f32.gmra.mrb[0].mxu0 %v1171
  %v1502 = vpop.f32.mrb[0].mxu0
  %v1503 = vadd.f32 0.0, %v1502
  %v1504 = vpop.f32.mrb[0].mxu0
  %1505 = vmatprep.mubr.f32.mxu0 0.0
  %1506 = vmatmul.mubr.f32.gmra.mrb[0].mxu0 %v1174
  %v1507 = vpop.f32.mrb[0].mxu0
  %v1508 = vadd.f32 0.0, %v1507
  %v1509 = vpop.f32.mrb[0].mxu0
  %1510 = vmatprep.mubr.f32.mxu0 0.0
  %1511 = vmatmul.mubr.f32.gmra.mrb[0].mxu0 %v1177
  %v1512 = vpop.f32.mrb[0].mxu0
  %v1513 = vadd.f32 0.0, %v1512
  %v1514 = vpop.f32.mrb[0].mxu0
  %1515 = vmatprep.mubr.f32.mxu0 0.0
  %1516 = vmatmul.mubr.f32.gmra.mrb[0].mxu0 %v1180
  %v1517 = vpop.f32.mrb[0].mxu0
  %v1518 = vadd.f32 0.0, %v1517
  %v1519 = vpop.f32.mrb[0].mxu0
  %1520 = vmatprep.mubr.f32.mxu0 0.0
  %1521 = vmatmul.mubr.f32.gmra.mrb[0].mxu0 %v1183
  %v1522 = vpop.f32.mrb[0].mxu0
  %v1523 = vadd.f32 0.0, %v1522
  %v1524 = vpop.f32.mrb[0].mxu0
  %1525 = vmatprep.mubr.f32.mxu0 0.0
  %1526 = vmatmul.mubr.f32.gmra.mrb[0].mxu0 %v1186
  %v1527 = vpop.f32.mrb[0].mxu0
  %v1528 = vadd.f32 0.0, %v1527
  %v1529 = vpop.f32.mrb[0].mxu0
  %1530 = vmatprep.mubr.f32.mxu0 0.0
  %1531 = vmatmul.mubr.f32.gmra.mrb[0].mxu0 %v1189
  %v1532 = vpop.f32.mrb[0].mxu0
  %v1533 = vadd.f32 0.0, %v1532
  %v1534 = vpop.f32.mrb[0].mxu0
  %1535 = vmatprep.mubr.f32.mxu0 0.0
  %1536 = vmatmul.mubr.f32.gmra.mrb[0].mxu0 %v1192
  %v1537 = vpop.f32.mrb[0].mxu0
  %v1538 = vadd.f32 0.0, %v1537
  %v1539 = vpop.f32.mrb[0].mxu0
  %1540 = vmatprep.mubr.f32.mxu0 0.0
  %1541 = vmatmul.mubr.f32.gmra.mrb[0].mxu0 %v1195
  %v1542 = vpop.f32.mrb[0].mxu0
  %v1543 = vadd.f32 0.0, %v1542
  %v1544 = vpop.f32.mrb[0].mxu0
  %1545 = vmatprep.mubr.f32.mxu0 0.0
  %1546 = vmatmul.mubr.f32.gmra.mrb[0].mxu0 %v1198
  %v1547 = vpop.f32.mrb[0].mxu0
  %v1548 = vadd.f32 0.0, %v1547
  %v1549 = vpop.f32.mrb[0].mxu0
  %1550 = vmatprep.mubr.f32.mxu0 0.0
  %1551 = vmatmul.mubr.f32.gmra.mrb[0].mxu0 %v1201
  %v1552 = vpop.f32.mrb[0].mxu0
  %v1553 = vadd.f32 0.0, %v1552
  %v1554 = vpop.f32.mrb[0].mxu0
  %1555 = vmatprep.mubr.f32.mxu0 0.0
  %1556 = vmatmul.mubr.f32.gmra.mrb[0].mxu0 %v1204
  %v1557 = vpop.f32.mrb[0].mxu0
  %v1558 = vadd.f32 0.0, %v1557
  %v1559 = vpop.f32.mrb[0].mxu0
  %1560 = vmatprep.mubr.f32.mxu0 0.0
  %1561 = vmatmul.mubr.f32.gmra.mrb[0].mxu0 %v1207
  %v1562 = vpop.f32.mrb[0].mxu0
  %v1563 = vadd.f32 0.0, %v1562
  %v1564 = vpop.f32.mrb[0].mxu0
  %1565 = vmatprep.mubr.f32.mxu0 0.0
  %1566 = vmatmul.mubr.f32.gmra.mrb[0].mxu0 %v1210
  %v1567 = vpop.f32.mrb[0].mxu0
  %v1568 = vadd.f32 0.0, %v1567
  %v1569 = vpop.f32.mrb[0].mxu0
  %1570 = vmatprep.mubr.f32.mxu0 0.0
  %1571 = vmatmul.mubr.f32.gmra.mrb[0].mxu0 %v1213
  %v1572 = vpop.f32.mrb[0].mxu0
  %v1573 = vadd.f32 0.0, %v1572
  %v1574 = vpop.f32.mrb[0].mxu0
  %1575 = vmatprep.mubr.f32.mxu0 0.0
  %1576 = vmatmul.mubr.f32.gmra.mrb[0].mxu0 %v1216
  %v1577 = vpop.f32.mrb[0].mxu0
  %v1578 = vadd.f32 0.0, %v1577
  %v1579 = vpop.f32.mrb[0].mxu0
  %1580 = vmatprep.mubr.f32.mxu0 0.0
  %1581 = vmatmul.mubr.f32.gmra.mrb[0].mxu0 %v1219
  %v1582 = vpop.f32.mrb[0].mxu0
  %v1583 = vadd.f32 0.0, %v1582
  %v1584 = vpop.f32.mrb[0].mxu0
  %1585 = vmatprep.mubr.f32.mxu0 0.0
  %1586 = vmatmul.mubr.f32.gmra.mrb[0].mxu0 %v1222
  %v1587 = vpop.f32.mrb[0].mxu0
  %v1588 = vadd.f32 0.0, %v1587
  %v1589 = vpop.f32.mrb[0].mxu0
  %1590 = vmatprep.mubr.f32.mxu0 0.0
  %1591 = vmatmul.mubr.f32.gmra.mrb[0].mxu0 %v1225
  %v1592 = vpop.f32.mrb[0].mxu0
  %v1593 = vadd.f32 0.0, %v1592
  %v1594 = vpop.f32.mrb[0].mxu0
  %1595 = vmatprep.mubr.f32.mxu0 0.0
  %1596 = vmatmul.mubr.f32.gmra.mrb[0].mxu0 %v1228
  %v1597 = vpop.f32.mrb[0].mxu0
  %v1598 = vadd.f32 0.0, %v1597
  %v1599 = vpop.f32.mrb[0].mxu0
  %1600 = vmatprep.mubr.f32.mxu0 0.0
  %1601 = vmatmul.mubr.f32.gmra.mrb[0].mxu0 %v1231
  %v1602 = vpop.f32.mrb[0].mxu0
  %v1603 = vadd.f32 0.0, %v1602
  %v1604 = vpop.f32.mrb[0].mxu0
  %1605 = vmatprep.mubr.f32.mxu0 0.0
  %1606 = vmatmul.mubr.f32.gmra.mrb[0].mxu0 %v1234
  %v1607 = vpop.f32.mrb[0].mxu0
  %v1608 = vadd.f32 0.0, %v1607
  %v1609 = vpop.f32.mrb[0].mxu0
  %1610 = vmatprep.mubr.f32.mxu0 0.0
  %1611 = vmatmul.mubr.f32.gmra.mrb[0].mxu0 %v1237
  %v1612 = vpop.f32.mrb[0].mxu0
  %v1613 = vadd.f32 0.0, %v1612
  %v1614 = vpop.f32.mrb[0].mxu0
  %1615 = vmatprep.mubr.f32.mxu0 0.0
  %1616 = vmatmul.mubr.f32.gmra.mrb[0].mxu0 %v1240
  %v1617 = vpop.f32.mrb[0].mxu0
  %v1618 = vadd.f32 0.0, %v1617
  %v1619 = vpop.f32.mrb[0].mxu0
  %1620 = vmatprep.mubr.f32.mxu0 0.0
  %1621 = vmatmul.mubr.f32.gmra.mrb[0].mxu0 %v1243
  %v1622 = vpop.f32.mrb[0].mxu0
  %v1623 = vadd.f32 0.0, %v1622
  %v1624 = vpop.f32.mrb[0].mxu0
  %1625 = vmatprep.mubr.f32.mxu0 0.0
  %1626 = vmatmul.mubr.f32.gmra.mrb[0].mxu0 %v1246
  %v1627 = vpop.f32.mrb[0].mxu0
  %v1628 = vadd.f32 0.0, %v1627
  %v1629 = vpop.f32.mrb[0].mxu0
  %1630 = vmatprep.mubr.f32.mxu0 0.0
  %1631 = vmatmul.mubr.f32.gmra.mrb[0].mxu0 %v1249
  %v1632 = vpop.f32.mrb[0].mxu0
  %v1633 = vadd.f32 0.0, %v1632
  %v1634 = vpop.f32.mrb[0].mxu0
  %1635 = vdwg.mxu0
  %vm1636 = vcmask 392192
  %1637 = vst.msk [vmem:[%s4] sm:$0xff] %vm1636, %v1318
  %1638 = vst.msk [vmem:[%s4 + $0x8] sm:$0xff] %vm1636, %v1323
  %1639 = vst.msk [vmem:[%s4 + $0x10] sm:$0xff] %vm1636, %v1328
  %1640 = vst.msk [vmem:[%s4 + $0x18] sm:$0xff] %vm1636, %v1333
  %1641 = vst.msk [vmem:[%s4 + $0x20] sm:$0xff] %vm1636, %v1338
  %1642 = vst.msk [vmem:[%s4 + $0x28] sm:$0xff] %vm1636, %v1343
  %1643 = vst.msk [vmem:[%s4 + $0x30] sm:$0xff] %vm1636, %v1348
  %1644 = vst.msk [vmem:[%s4 + $0x38] sm:$0xff] %vm1636, %v1353
  %1645 = vst.msk [vmem:[%s4 + $0x40] sm:$0xff] %vm1636, %v1358
  %1646 = vst.msk [vmem:[%s4 + $0x48] sm:$0xff] %vm1636, %v1363
  %1647 = vst.msk [vmem:[%s4 + $0x50] sm:$0xff] %vm1636, %v1368
  %1648 = vst.msk [vmem:[%s4 + $0x58] sm:$0xff] %vm1636, %v1373
  %1649 = vst.msk [vmem:[%s4 + $0x60] sm:$0xff] %vm1636, %v1378
  %1650 = vst.msk [vmem:[%s4 + $0x68] sm:$0xff] %vm1636, %v1383
  %1651 = vst.msk [vmem:[%s4 + $0x70] sm:$0xff] %vm1636, %v1388
  %1652 = vst.msk [vmem:[%s4 + $0x78] sm:$0xff] %vm1636, %v1393
  %1653 = vst.msk [vmem:[%s4 + $0x80] sm:$0xff] %vm1636, %v1398
  %1654 = vst.msk [vmem:[%s4 + $0x88] sm:$0xff] %vm1636, %v1403
  %1655 = vst.msk [vmem:[%s4 + $0x90] sm:$0xff] %vm1636, %v1408
  %1656 = vst.msk [vmem:[%s4 + $0x98] sm:$0xff] %vm1636, %v1413
  %1657 = vst.msk [vmem:[%s4 + $0xa0] sm:$0xff] %vm1636, %v1418
  %1658 = vst.msk [vmem:[%s4 + $0xa8] sm:$0xff] %vm1636, %v1423
  %1659 = vst.msk [vmem:[%s4 + $0xb0] sm:$0xff] %vm1636, %v1428
  %1660 = vst.msk [vmem:[%s4 + $0xb8] sm:$0xff] %vm1636, %v1433
  %1661 = vst.msk [vmem:[%s4 + $0xc0] sm:$0xff] %vm1636, %v1438
  %1662 = vst.msk [vmem:[%s4 + $0xc8] sm:$0xff] %vm1636, %v1443
  %1663 = vst.msk [vmem:[%s4 + $0xd0] sm:$0xff] %vm1636, %v1448
  %1664 = vst.msk [vmem:[%s4 + $0xd8] sm:$0xff] %vm1636, %v1453
  %1665 = vst.msk [vmem:[%s4 + $0xe0] sm:$0xff] %vm1636, %v1458
  %1666 = vst.msk [vmem:[%s4 + $0xe8] sm:$0xff] %vm1636, %v1463
  %1667 = vst.msk [vmem:[%s4 + $0xf0] sm:$0xff] %vm1636, %v1468
  %1668 = vst.msk [vmem:[%s4 + $0xf8] sm:$0xff] %vm1636, %v1473
  %1669 = vst.msk [vmem:[%s4 + $0x100] sm:$0xff] %vm1636, %v1478
  %1670 = vst.msk [vmem:[%s4 + $0x108] sm:$0xff] %vm1636, %v1483
  %1671 = vst.msk [vmem:[%s4 + $0x110] sm:$0xff] %vm1636, %v1488
  %1672 = vst.msk [vmem:[%s4 + $0x118] sm:$0xff] %vm1636, %v1493
  %1673 = vst.msk [vmem:[%s4 + $0x120] sm:$0xff] %vm1636, %v1498
  %1674 = vst.msk [vmem:[%s4 + $0x128] sm:$0xff] %vm1636, %v1503
  %1675 = vst.msk [vmem:[%s4 + $0x130] sm:$0xff] %vm1636, %v1508
  %1676 = vst.msk [vmem:[%s4 + $0x138] sm:$0xff] %vm1636, %v1513
  %1677 = vst.msk [vmem:[%s4 + $0x140] sm:$0xff] %vm1636, %v1518
  %1678 = vst.msk [vmem:[%s4 + $0x148] sm:$0xff] %vm1636, %v1523
  %1679 = vst.msk [vmem:[%s4 + $0x150] sm:$0xff] %vm1636, %v1528
  %1680 = vst.msk [vmem:[%s4 + $0x158] sm:$0xff] %vm1636, %v1533
  %1681 = vst.msk [vmem:[%s4 + $0x160] sm:$0xff] %vm1636, %v1538
  %1682 = vst.msk [vmem:[%s4 + $0x168] sm:$0xff] %vm1636, %v1543
  %1683 = vst.msk [vmem:[%s4 + $0x170] sm:$0xff] %vm1636, %v1548
  %1684 = vst.msk [vmem:[%s4 + $0x178] sm:$0xff] %vm1636, %v1553
  %1685 = vst.msk [vmem:[%s4 + $0x180] sm:$0xff] %vm1636, %v1558
  %1686 = vst.msk [vmem:[%s4 + $0x188] sm:$0xff] %vm1636, %v1563
  %1687 = vst.msk [vmem:[%s4 + $0x190] sm:$0xff] %vm1636, %v1568
  %1688 = vst.msk [vmem:[%s4 + $0x198] sm:$0xff] %vm1636, %v1573
  %1689 = vst.msk [vmem:[%s4 + $0x1a0] sm:$0xff] %vm1636, %v1578
  %1690 = vst.msk [vmem:[%s4 + $0x1a8] sm:$0xff] %vm1636, %v1583
  %1691 = vst.msk [vmem:[%s4 + $0x1b0] sm:$0xff] %vm1636, %v1588
  %1692 = vst.msk [vmem:[%s4 + $0x1b8] sm:$0xff] %vm1636, %v1593
  %1693 = vst.msk [vmem:[%s4 + $0x1c0] sm:$0xff] %vm1636, %v1598
  %1694 = vst.msk [vmem:[%s4 + $0x1c8] sm:$0xff] %vm1636, %v1603
  %1695 = vst.msk [vmem:[%s4 + $0x1d0] sm:$0xff] %vm1636, %v1608
  %1696 = vst.msk [vmem:[%s4 + $0x1d8] sm:$0xff] %vm1636, %v1613
  %1697 = vst.msk [vmem:[%s4 + $0x1e0] sm:$0xff] %vm1636, %v1618
  %1698 = vst.msk [vmem:[%s4 + $0x1e8] sm:$0xff] %vm1636, %v1623
  %1699 = vst.msk [vmem:[%s4 + $0x1f0] sm:$0xff] %vm1636, %v1628
  %1700 = vst.msk [vmem:[%s4 + $0x1f8] sm:$0xff] %vm1636, %v1633
  // Predicated region
  $region18: #{tpu_custom_call.1} parent=0 // pred_check
    _
  $region19: #{tpu_custom_call.1} parent=0 // pred_check_branch
    %1702 = sbr.rel (0) target = $region21
  $region20: #{tpu_custom_call.1} parent=0 // pred_region
    _
  $region21: #{tpu_custom_call.1} parent=0 // pred_fallthru
    _
  // Predicated region
  $region22: #{tpu_custom_call.1} parent=0 // pred_check
    _
  $region23: #{tpu_custom_call.1} parent=0 // pred_check_branch
    %1704 = sbr.rel (0) target = $region25
  $region24: #{tpu_custom_call.1} parent=0 // pred_region
    _
  $region25: #{tpu_custom_call.1} parent=0 // pred_fallthru
    _

</llo_original>
